<compile_context>
chip_gen: v6e
topology: v6e:2x2x1
jax: 0.10.0
libtpu: 0.0.40
codegen_flags: <defaults>
</compile_context>

<pallas_src>
import functools

import jax
import jax.numpy as jnp
from jax.experimental import pallas as pl
from jax.experimental.pallas import tpu as pltpu


# --------------------------------------------------------------------------
# Fused whole-network kernel (B_TILE batch elements per grid step).
# --------------------------------------------------------------------------
def _fused_tcn_kernel(*refs, layer_cfgs, K, T, b_tile, p_max, mxu_dtype):
    # refs layout (inputs, outputs, scratch):
    #   x_ref                                  (b_tile, T, Cin0)
    #   per layer i:
    #     w1 (K*Cin_i, Cout_i), b1 (1, Cout_i),
    #     w2 (K*Cout_i, Cout_i), b2 (1, Cout_i),
    #     [wd (Cin_i, Cout_i), bd (1, Cout_i)]   only if Cin_i != Cout_i
    #   wl (C_last, 2*O), bl (1, 2*O)
    #   out_ref (b_tile, 2*O)
    #   pad_ref (b_tile, p_max + T, C_max)       scratch (only if p_max > 0)
    idx = 0
    x_ref = refs[idx]; idx += 1
    layer_refs = []
    for cfg in layer_cfgs:
        n = 6 if cfg["has_ds"] else 4
        layer_refs.append(refs[idx:idx + n])
        idx += n
    wl_ref = refs[idx]; idx += 1
    bl_ref = refs[idx]; idx += 1
    out_ref = refs[idx]; idx += 1
    pad_ref = refs[idx] if p_max > 0 else None

    BT = b_tile * T

    def mm(a, b):
        # MXU matmul; optionally bf16 operands (v6e/v7x), always f32 accumulate.
        return jnp.dot(a.astype(mxu_dtype), b.astype(mxu_dtype),
                       preferred_element_type=jnp.float32)

    if p_max > 0:
        # Zero the causal-pad rows once per grid step.  Activations only ever
        # land in rows [p_max, p_max + T), so the pad region stays zero for all
        # layers and all channel widths (columns were zeroed up to C_max).
        pad_ref[:, :p_max, :] = jnp.zeros(
            (b_tile, p_max, pad_ref.shape[2]), jnp.float32)

    def dilated_causal_conv(h2, w_ref, b_ref, d, cin):
        # h2: (B_TILE*T, cin) flattened activations.  One accumulating matmul
        # per dilated tap; shifted taps are static slices of the persistent
        # padded scratch (no concatenate copies, no im2col lane concat).
        cout = w_ref.shape[1]
        if p_max > 0 and K > 1:
            pad_ref[:, p_max:p_max + T, :cin] = h2.reshape(b_tile, T, cin)
        acc = jnp.zeros((BT, cout), jnp.float32)
        for k in range(K):
            s0 = p_max - (K - 1 - k) * d          # static time offset
            if s0 == p_max:                        # zero-shift tap: use h2 directly
                tap = h2
            else:
                tap = pad_ref[:, s0:s0 + T, :cin].reshape(BT, cin)
            acc = acc + mm(tap, w_ref[k * cin:(k + 1) * cin, :])
        return acc + b_ref[...]

    cin0 = x_ref.shape[2]
    h = x_ref[...].astype(jnp.float32).reshape(BT, cin0)   # (B_TILE*T, Cin0)

    for cfg, lrefs in zip(layer_cfgs, layer_refs):
        d = cfg["dilation"]
        if cfg["has_ds"]:
            w1_ref, b1_ref, w2_ref, b2_ref, wd_ref, bd_ref = lrefs
        else:
            w1_ref, b1_ref, w2_ref, b2_ref = lrefs

        cin = h.shape[1]
        # conv1 -> ReLU  (dropout1 = identity in eval)
        h1 = jnp.maximum(dilated_causal_conv(h, w1_ref, b1_ref, d, cin), 0.0)
        cmid = h1.shape[1]
        # conv2 -> ReLU  (dropout2 = identity in eval)
        h2 = jnp.maximum(dilated_causal_conv(h1, w2_ref, b2_ref, d, cmid), 0.0)
        # residual: 1x1 conv only when channel counts differ, else plain identity
        if cfg["has_ds"]:
            res = mm(h, wd_ref[...]) + bd_ref[...]
        else:
            res = h
        h = jnp.maximum(h2 + res, 0.0)

    # Both heads fused: gather the B_TILE last-timestep rows into one matrix,
    # one matmul, one batched (B_TILE, 2*O) store.
    c_last = h.shape[1]
    f = h.reshape(b_tile, T, c_last)[:, T - 1, :]            # (b_tile, c_last)
    out_ref[...] = mm(f, wl_ref[...]) + bl_ref[...]


# --------------------------------------------------------------------------
# Wrapper: builds specs, launches ONE pallas_call for the entire forward pass.
# --------------------------------------------------------------------------
def _pick_b_tile(B, T, target_rows=256):
    """Largest divisor of B with B_TILE*T <= target_rows (MXU-friendly M ~256).
    If that collapses the grid to 1 step while a >=128-row tile still gives
    >=2 steps (v7x has 2 TensorCores), prefer the smaller tile."""
    best = 1
    for d in range(1, B + 1):
        if B % d == 0 and d * T <= target_rows:
            best = d
    if B // best == 1:
        for d in range(best - 1, 0, -1):
            if B % d == 0 and d * T >= 128:
                best = d
                break
    return best


def make_forward_fn(layer_cfgs, kernel_size, *, mxu_dtype=jnp.float32,
                    weight_buffer_count=None, b_tile=None):
    layer_cfgs = tuple({"dilation": int(c["dilation"]),
                        "has_ds": bool(c["has_ds"])} for c in layer_cfgs)
    K = int(kernel_size)

    @jax.jit
    def forward(x_nct, arrays):
        # x_nct: [B, in_dim, T] (PyTorch NCT) -> channels-last so lanes=channels.
        # (For large inputs, feed channels-last upstream to skip this XLA copy.)
        x = jnp.transpose(x_nct, (0, 2, 1)).astype(jnp.float32)   # [B, T, Cin0]
        B, T, cin0 = x.shape
        o2 = arrays["wl_cat"].shape[1]

        bt = b_tile if b_tile is not None else _pick_b_tile(B, T)
        assert B % bt == 0, "batch must be divisible by the chosen B_TILE"
        p_max = (K - 1) * max(c["dilation"] for c in layer_cfgs)
        # Widest conv-input channel count (shared padded scratch width).
        c_max = cin0
        for blk in arrays["blocks"]:
            c_max = max(c_max, blk["w1"].shape[0] // K, blk["w1"].shape[1])

        w_pipe = (dict(pipeline_mode=pl.Buffered(weight_buffer_count))
                  if weight_buffer_count is not None else {})

        def weight_spec(arr):
            nd = arr.ndim
            return pl.BlockSpec(arr.shape, lambda b, _nd=nd: (0,) * _nd, **w_pipe)

        flat_inputs = [x]
        in_specs = [pl.BlockSpec((bt, T, cin0), lambda b: (b, 0, 0))]
        for blk, cfg in zip(arrays["blocks"], layer_cfgs):
            names = ["w1", "b1", "w2", "b2"] + (["wd", "bd"] if cfg["has_ds"] else [])
            for nm in names:
                flat_inputs.append(blk[nm])
                in_specs.append(weight_spec(blk[nm]))
        for nm in ("wl_cat", "bl_cat"):
            flat_inputs.append(arrays[nm])
            in_specs.append(weight_spec(arrays[nm]))

        scratch_shapes = []
        if p_max > 0:
            scratch_shapes.append(pltpu.VMEM((bt, p_max + T, c_max), jnp.float32))

        # Rough VMEM budget (Pallas double-buffers blocks by default); raise the
        # scoped-VMEM cap only when a scaled config needs it, staying below the
        # smallest physical VMEM across generations (64 MiB on v7x).
        weight_bytes = sum(int(a.size) * a.dtype.itemsize for a in flat_inputs[1:])
        x_block_bytes = bt * T * cin0 * 4
        out_block_bytes = bt * o2 * 4
        scratch_bytes = (bt * (p_max + T) * c_max * 4) if p_max > 0 else 0
        wbuf = 1 if weight_buffer_count == 1 else 2
        vmem_needed = (2 * (x_block_bytes + out_block_bytes)
                       + wbuf * weight_bytes + scratch_bytes)
        cp_kwargs = dict(dimension_semantics=("parallel",))
        if vmem_needed > 16 * 1024 * 1024:
            cp_kwargs["vmem_limit_bytes"] = min(
                int(1.25 * vmem_needed) + (1 << 20), 60 * 1024 * 1024)

        kernel = functools.partial(
            _fused_tcn_kernel, layer_cfgs=layer_cfgs, K=K, T=T,
            b_tile=bt, p_max=p_max, mxu_dtype=mxu_dtype)

        out = pl.pallas_call(
            kernel,
            out_shape=jax.ShapeDtypeStruct((B, o2), jnp.float32),
            grid_spec=pltpu.PrefetchScalarGridSpec(
                num_scalar_prefetch=0,
                grid=(B // bt,),
                in_specs=in_specs,
                out_specs=pl.BlockSpec((bt, o2), lambda b: (b, 0)),
                scratch_shapes=scratch_shapes),
            compiler_params=pltpu.CompilerParams(**cp_kwargs),
        )(*flat_inputs)

        o = o2 // 2
        return out[:, :o], out[:, o:]

    return forward


# --------------------------------------------------------------------------
# Parameter setup (deterministic, synthetic) — weight-norm folded, im2col-packed.
# --------------------------------------------------------------------------
def _weight_norm(v, g):
    """PyTorch weight_norm (dim=0): w = g * v / ||v|| per output channel.
    v: [Cout, Cin, K], g: [Cout] -> [Cout, Cin, K]."""
    norm = jnp.sqrt(jnp.sum(v * v, axis=(1, 2), keepdims=True))
    return g[:, None, None] * v / norm


def init_params(key, input_size, output_size, num_channels, kernel_size):
    blocks = []
    layer_cfgs = []
    in_ch = input_size
    for i, out_ch in enumerate(num_channels):
        key, *ks = jax.random.split(key, 9)
        v1 = 0.01 * jax.random.normal(ks[0], (out_ch, in_ch, kernel_size), jnp.float32)
        g1 = 0.5 + jax.random.uniform(ks[1], (out_ch,), jnp.float32)
        b1 = 0.05 * jax.random.normal(ks[2], (out_ch,), jnp.float32)
        v2 = 0.01 * jax.random.normal(ks[3], (out_ch, out_ch, kernel_size), jnp.float32)
        g2 = 0.5 + jax.random.uniform(ks[4], (out_ch,), jnp.float32)
        b2 = 0.05 * jax.random.normal(ks[5], (out_ch,), jnp.float32)

        # [Cout, Cin, K] -> [K, Cin, Cout] -> tap-packed [K*Cin, Cout]
        w1 = jnp.transpose(_weight_norm(v1, g1), (2, 1, 0)).reshape(
            kernel_size * in_ch, out_ch)
        w2 = jnp.transpose(_weight_norm(v2, g2), (2, 1, 0)).reshape(
            kernel_size * out_ch, out_ch)

        blk = {"w1": w1, "b1": b1.reshape(1, -1),
               "w2": w2, "b2": b2.reshape(1, -1)}
        has_ds = in_ch != out_ch
        if has_ds:
            wd = 0.01 * jax.random.normal(ks[6], (out_ch, in_ch), jnp.float32)
            bd = 0.05 * jax.random.normal(ks[7], (out_ch,), jnp.float32)
            blk["wd"] = jnp.transpose(wd, (1, 0))      # [Cin, Cout]
            blk["bd"] = bd.reshape(1, -1)
        blocks.append(blk)
        layer_cfgs.append({"dilation": 2 ** i, "has_ds": has_ds})
        in_ch = out_ch

    key, k1, k2, k3, k4 = jax.random.split(key, 5)
    c_last = num_channels[-1]
    wl1 = 0.01 * jax.random.normal(k1, (output_size, c_last), jnp.float32)
    bl1 = 0.05 * jax.random.normal(k2, (output_size,), jnp.float32)
    wl2 = 0.01 * jax.random.normal(k3, (output_size, c_last), jnp.float32)
    bl2 = 0.05 * jax.random.normal(k4, (output_size,), jnp.float32)
    wl_cat = jnp.concatenate([wl1.T, wl2.T], axis=1)   # [C_last, 2*O]
    bl_cat = jnp.concatenate([bl1, bl2]).reshape(1, -1)

    arrays = {"blocks": blocks, "wl_cat": wl_cat, "bl_cat": bl_cat}
    return arrays, layer_cfgs


# --------------------------------------------------------------------------
# Pure-JAX reference (per-tap conv path) for a numerics cross-check.
# --------------------------------------------------------------------------
def reference_forward(x_nct, arrays, layer_cfgs, K):
    x = jnp.transpose(x_nct, (0, 2, 1)).astype(jnp.float32)
    B, T, _ = x.shape
    for blk, cfg in zip(arrays["blocks"], layer_cfgs):
        d = cfg["dilation"]
        p = (K - 1) * d

        def conv(v, w_cat, b):
            c = v.shape[2]
            w = w_cat.reshape(K, c, -1)
            vp = jnp.pad(v, ((0, 0), (p, 0), (0, 0)))
            acc = jnp.zeros((B, T, w.shape[2]), jnp.float32)
            for k in range(K):
                acc = acc + jnp.einsum("btc,cd->btd", vp[:, k * d:k * d + T, :], w[k])
            return acc + b

        h1 = jnp.maximum(conv(x, blk["w1"], blk["b1"]), 0.0)
        h2 = jnp.maximum(conv(h1, blk["w2"], blk["b2"]), 0.0)
        if cfg["has_ds"]:
            res = jnp.einsum("btc,cd->btd", x, blk["wd"]) + blk["bd"]
        else:
            res = x
        x = jnp.maximum(h2 + res, 0.0)
    f = x[:, -1, :]
    o = f @ arrays["wl_cat"] + arrays["bl_cat"]
    half = o.shape[1] // 2
    return o[:, :half], o[:, half:]


if __name__ == "__main__":
    # Small config consistent with NilocTCN(input_size, output_size, num_channels,
    # kernel_size, dropout); dilations 1,2,4 exercise identity + 1x1 residual paths.
    B, T = 2, 16
    input_size, output_size = 8, 6
    num_channels = [16, 16, 32]
    kernel_size = 2

    key = jax.random.PRNGKey(0)
    key, kx = jax.random.split(key)
    x = jax.random.normal(kx, (B, input_size, T), jnp.float32)  # PyTorch NCT input

    arrays, layer_cfgs = init_params(key, input_size, output_size,
                                     num_channels, kernel_size)
    # Default: exact f32 path.  For scaled configs on v6e/v7x pass
    # mxu_dtype=jnp.bfloat16 and/or weight_buffer_count=1 (relax tolerances).
    forward = make_forward_fn(layer_cfgs, kernel_size)

    x1, x2 = forward(x, arrays)
    x1 = jax.block_until_ready(x1)
    x2 = jax.block_until_ready(x2)

    assert x1.shape == (B, output_size) and x2.shape == (B, output_size)
    assert bool(jnp.all(jnp.isfinite(x1))) and bool(jnp.all(jnp.isfinite(x2)))

    # Cross-check against an independent pure-JAX per-tap implementation.
    r1, r2 = reference_forward(x, arrays, layer_cfgs, kernel_size)
    assert bool(jnp.allclose(x1, r1, rtol=1e-5, atol=1e-5))
    assert bool(jnp.allclose(x2, r2, rtol=1e-5, atol=1e-5))

    print("KERNEL_OK")
</pallas_src>

<mosaic_0001>
module attributes {stable_mosaic.version = 11 : i64} {
  func.func @_fused_tcn_kernel(%arg0: i32, %arg1: memref<2x16x8xf32, #tpu.memory_space<vmem>>, %arg2: memref<16x16xf32, #tpu.memory_space<vmem>>, %arg3: memref<1x16xf32, #tpu.memory_space<vmem>>, %arg4: memref<32x16xf32, #tpu.memory_space<vmem>>, %arg5: memref<1x16xf32, #tpu.memory_space<vmem>>, %arg6: memref<8x16xf32, #tpu.memory_space<vmem>>, %arg7: memref<1x16xf32, #tpu.memory_space<vmem>>, %arg8: memref<32x16xf32, #tpu.memory_space<vmem>>, %arg9: memref<1x16xf32, #tpu.memory_space<vmem>>, %arg10: memref<32x16xf32, #tpu.memory_space<vmem>>, %arg11: memref<1x16xf32, #tpu.memory_space<vmem>>, %arg12: memref<32x32xf32, #tpu.memory_space<vmem>>, %arg13: memref<1x32xf32, #tpu.memory_space<vmem>>, %arg14: memref<64x32xf32, #tpu.memory_space<vmem>>, %arg15: memref<1x32xf32, #tpu.memory_space<vmem>>, %arg16: memref<16x32xf32, #tpu.memory_space<vmem>>, %arg17: memref<1x32xf32, #tpu.memory_space<vmem>>, %arg18: memref<32x12xf32, #tpu.memory_space<vmem>>, %arg19: memref<1x12xf32, #tpu.memory_space<vmem>>, %arg20: memref<2x12xf32, #tpu.memory_space<vmem>>, %arg21: memref<2x20x32xf32, #tpu.memory_space<vmem>>) attributes {dimension_semantics = [#tpu.dimension_semantics<parallel>], iteration_bounds = array<i64: 1>, scalar_prefetch = 0 : i64, scratch_operands = 1 : i64, tpu.core_type = #tpu.core_type<tc>, window_params = [{transform_indices = @transform_0, window_bounds = array<i64: 2, 16, 8>}, {pipeline_mode = #tpu.pipeline_mode<synchronous>, transform_indices = @transform_1, window_bounds = array<i64: 16, 16>}, {pipeline_mode = #tpu.pipeline_mode<synchronous>, transform_indices = @transform_2, window_bounds = array<i64: 1, 16>}, {pipeline_mode = #tpu.pipeline_mode<synchronous>, transform_indices = @transform_3, window_bounds = array<i64: 32, 16>}, {pipeline_mode = #tpu.pipeline_mode<synchronous>, transform_indices = @transform_4, window_bounds = array<i64: 1, 16>}, {pipeline_mode = #tpu.pipeline_mode<synchronous>, transform_indices = @transform_5, window_bounds = array<i64: 8, 16>}, {pipeline_mode = #tpu.pipeline_mode<synchronous>, transform_indices = @transform_6, window_bounds = array<i64: 1, 16>}, {pipeline_mode = #tpu.pipeline_mode<synchronous>, transform_indices = @transform_7, window_bounds = array<i64: 32, 16>}, {pipeline_mode = #tpu.pipeline_mode<synchronous>, transform_indices = @transform_8, window_bounds = array<i64: 1, 16>}, {pipeline_mode = #tpu.pipeline_mode<synchronous>, transform_indices = @transform_9, window_bounds = array<i64: 32, 16>}, {pipeline_mode = #tpu.pipeline_mode<synchronous>, transform_indices = @transform_10, window_bounds = array<i64: 1, 16>}, {pipeline_mode = #tpu.pipeline_mode<synchronous>, transform_indices = @transform_11, window_bounds = array<i64: 32, 32>}, {pipeline_mode = #tpu.pipeline_mode<synchronous>, transform_indices = @transform_12, window_bounds = array<i64: 1, 32>}, {pipeline_mode = #tpu.pipeline_mode<synchronous>, transform_indices = @transform_13, window_bounds = array<i64: 64, 32>}, {pipeline_mode = #tpu.pipeline_mode<synchronous>, transform_indices = @transform_14, window_bounds = array<i64: 1, 32>}, {pipeline_mode = #tpu.pipeline_mode<synchronous>, transform_indices = @transform_15, window_bounds = array<i64: 16, 32>}, {pipeline_mode = #tpu.pipeline_mode<synchronous>, transform_indices = @transform_16, window_bounds = array<i64: 1, 32>}, {pipeline_mode = #tpu.pipeline_mode<synchronous>, transform_indices = @transform_17, window_bounds = array<i64: 32, 12>}, {pipeline_mode = #tpu.pipeline_mode<synchronous>, transform_indices = @transform_18, window_bounds = array<i64: 1, 12>}, {transform_indices = @transform_19, window_bounds = array<i64: 2, 12>}]} {
    %cst = arith.constant 0.000000e+00 : f32
    %0 = vector.broadcast %cst : f32 to vector<2x4x32xf32>
    %c0 = arith.constant 0 : index
    %c0_0 = arith.constant 0 : index
    %c0_1 = arith.constant 0 : index
    %1 = vector.load %arg21[%c0, %c0_0, %c0_1] : memref<2x20x32xf32, #tpu.memory_space<vmem>>, vector<2x4x32xf32>
    tpu.vector_store %arg21[%c0, %c0_0, %c0_1], %0 {strides = array<i32>} : memref<2x20x32xf32, #tpu.memory_space<vmem>>, vector<2x4x32xf32>,
    %c0_2 = arith.constant 0 : index
    %c0_3 = arith.constant 0 : index
    %c0_4 = arith.constant 0 : index
    %2 = vector.load %arg1[%c0_2, %c0_3, %c0_4] : memref<2x16x8xf32, #tpu.memory_space<vmem>>, vector<2x16x8xf32>
    %3 = vector.shape_cast %2 : vector<2x16x8xf32> to vector<32x8xf32>
    %4 = vector.shape_cast %3 : vector<32x8xf32> to vector<2x16x8xf32>
    %c0_5 = arith.constant 0 : index
    %c4 = arith.constant 4 : index
    %c0_6 = arith.constant 0 : index
    %5 = vector.load %arg21[%c0_5, %c4, %c0_6] : memref<2x20x32xf32, #tpu.memory_space<vmem>>, vector<2x16x8xf32>
    tpu.vector_store %arg21[%c0_5, %c4, %c0_6], %4 {strides = array<i32>} : memref<2x20x32xf32, #tpu.memory_space<vmem>>, vector<2x16x8xf32>,
    %cst_7 = arith.constant 0.000000e+00 : f32
    %6 = vector.broadcast %cst_7 : f32 to vector<32x16xf32>
    %c0_8 = arith.constant 0 : index
    %c3 = arith.constant 3 : index
    %c0_9 = arith.constant 0 : index
    %7 = vector.load %arg21[%c0_8, %c3, %c0_9] : memref<2x20x32xf32, #tpu.memory_space<vmem>>, vector<2x16x8xf32>
    %8 = vector.shape_cast %7 : vector<2x16x8xf32> to vector<32x8xf32>
    %c0_10 = arith.constant 0 : index
    %c0_11 = arith.constant 0 : index
    %9 = vector.load %arg2[%c0_10, %c0_11] : memref<16x16xf32, #tpu.memory_space<vmem>>, vector<8x16xf32>
    %cst_12 = arith.constant dense<0.000000e+00> : vector<32x16xf32>
    %10 = tpu.matmul %8, %9, %cst_12 {dimension_numbers = #tpu.dot_dimension_numbers<[1], [0], [0], [1], [0, 0, 1, 1], [], []>} : vector<32x8xf32>, vector<8x16xf32>, vector<32x16xf32> -> vector<32x16xf32>
    %11 = arith.addf %6, %10 : vector<32x16xf32>
    %c8 = arith.constant 8 : index
    %c0_13 = arith.constant 0 : index
    %12 = vector.load %arg2[%c8, %c0_13] : memref<16x16xf32, #tpu.memory_space<vmem>>, vector<8x16xf32>
    %cst_14 = arith.constant dense<0.000000e+00> : vector<32x16xf32>
    %13 = tpu.matmul %3, %12, %cst_14 {dimension_numbers = #tpu.dot_dimension_numbers<[1], [0], [0], [1], [0, 0, 1, 1], [], []>} : vector<32x8xf32>, vector<8x16xf32>, vector<32x16xf32> -> vector<32x16xf32>
    %14 = arith.addf %11, %13 : vector<32x16xf32>
    %c0_15 = arith.constant 0 : index
    %c0_16 = arith.constant 0 : index
    %15 = vector.load %arg3[%c0_15, %c0_16] : memref<1x16xf32, #tpu.memory_space<vmem>>, vector<1x16xf32>
    %16 = vector.broadcast %15 : vector<1x16xf32> to vector<32x16xf32>
    %17 = arith.addf %14, %16 : vector<32x16xf32>
    %cst_17 = arith.constant 0.000000e+00 : f32
    %18 = vector.broadcast %cst_17 : f32 to vector<32x16xf32>
    %19 = arith.maximumf %17, %18 : vector<32x16xf32>
    %20 = vector.shape_cast %19 : vector<32x16xf32> to vector<2x16x16xf32>
    %c0_18 = arith.constant 0 : index
    %c4_19 = arith.constant 4 : index
    %c0_20 = arith.constant 0 : index
    %21 = vector.load %arg21[%c0_18, %c4_19, %c0_20] : memref<2x20x32xf32, #tpu.memory_space<vmem>>, vector<2x16x16xf32>
    tpu.vector_store %arg21[%c0_18, %c4_19, %c0_20], %20 {strides = array<i32>} : memref<2x20x32xf32, #tpu.memory_space<vmem>>, vector<2x16x16xf32>,
    %cst_21 = arith.constant 0.000000e+00 : f32
    %22 = vector.broadcast %cst_21 : f32 to vector<32x16xf32>
    %c0_22 = arith.constant 0 : index
    %c3_23 = arith.constant 3 : index
    %c0_24 = arith.constant 0 : index
    %23 = vector.load %arg21[%c0_22, %c3_23, %c0_24] : memref<2x20x32xf32, #tpu.memory_space<vmem>>, vector<2x16x16xf32>
    %24 = vector.shape_cast %23 : vector<2x16x16xf32> to vector<32x16xf32>
    %c0_25 = arith.constant 0 : index
    %c0_26 = arith.constant 0 : index
    %25 = vector.load %arg4[%c0_25, %c0_26] : memref<32x16xf32, #tpu.memory_space<vmem>>, vector<16x16xf32>
    %cst_27 = arith.constant dense<0.000000e+00> : vector<32x16xf32>
    %26 = tpu.matmul %24, %25, %cst_27 {dimension_numbers = #tpu.dot_dimension_numbers<[1], [0], [0], [1], [0, 0, 1, 1], [], []>} : vector<32x16xf32>, vector<16x16xf32>, vector<32x16xf32> -> vector<32x16xf32>
    %27 = arith.addf %22, %26 : vector<32x16xf32>
    %c16 = arith.constant 16 : index
    %c0_28 = arith.constant 0 : index
    %28 = vector.load %arg4[%c16, %c0_28] : memref<32x16xf32, #tpu.memory_space<vmem>>, vector<16x16xf32>
    %cst_29 = arith.constant dense<0.000000e+00> : vector<32x16xf32>
    %29 = tpu.matmul %19, %28, %cst_29 {dimension_numbers = #tpu.dot_dimension_numbers<[1], [0], [0], [1], [0, 0, 1, 1], [], []>} : vector<32x16xf32>, vector<16x16xf32>, vector<32x16xf32> -> vector<32x16xf32>
    %30 = arith.addf %27, %29 : vector<32x16xf32>
    %c0_30 = arith.constant 0 : index
    %c0_31 = arith.constant 0 : index
    %31 = vector.load %arg5[%c0_30, %c0_31] : memref<1x16xf32, #tpu.memory_space<vmem>>, vector<1x16xf32>
    %32 = vector.broadcast %31 : vector<1x16xf32> to vector<32x16xf32>
    %33 = arith.addf %30, %32 : vector<32x16xf32>
    %cst_32 = arith.constant 0.000000e+00 : f32
    %34 = vector.broadcast %cst_32 : f32 to vector<32x16xf32>
    %35 = arith.maximumf %33, %34 : vector<32x16xf32>
    %c0_33 = arith.constant 0 : index
    %c0_34 = arith.constant 0 : index
    %36 = vector.load %arg6[%c0_33, %c0_34] : memref<8x16xf32, #tpu.memory_space<vmem>>, vector<8x16xf32>
    %cst_35 = arith.constant dense<0.000000e+00> : vector<32x16xf32>
    %37 = tpu.matmul %3, %36, %cst_35 {dimension_numbers = #tpu.dot_dimension_numbers<[1], [0], [0], [1], [0, 0, 1, 1], [], []>} : vector<32x8xf32>, vector<8x16xf32>, vector<32x16xf32> -> vector<32x16xf32>
    %c0_36 = arith.constant 0 : index
    %c0_37 = arith.constant 0 : index
    %38 = vector.load %arg7[%c0_36, %c0_37] : memref<1x16xf32, #tpu.memory_space<vmem>>, vector<1x16xf32>
    %39 = vector.broadcast %38 : vector<1x16xf32> to vector<32x16xf32>
    %40 = arith.addf %37, %39 : vector<32x16xf32>
    %41 = arith.addf %35, %40 : vector<32x16xf32>
    %cst_38 = arith.constant 0.000000e+00 : f32
    %42 = vector.broadcast %cst_38 : f32 to vector<32x16xf32>
    %43 = arith.maximumf %41, %42 : vector<32x16xf32>
    %44 = vector.shape_cast %43 : vector<32x16xf32> to vector<2x16x16xf32>
    %c0_39 = arith.constant 0 : index
    %c4_40 = arith.constant 4 : index
    %c0_41 = arith.constant 0 : index
    %45 = vector.load %arg21[%c0_39, %c4_40, %c0_41] : memref<2x20x32xf32, #tpu.memory_space<vmem>>, vector<2x16x16xf32>
    tpu.vector_store %arg21[%c0_39, %c4_40, %c0_41], %44 {strides = array<i32>} : memref<2x20x32xf32, #tpu.memory_space<vmem>>, vector<2x16x16xf32>,
    %cst_42 = arith.constant 0.000000e+00 : f32
    %46 = vector.broadcast %cst_42 : f32 to vector<32x16xf32>
    %c0_43 = arith.constant 0 : index
    %c2 = arith.constant 2 : index
    %c0_44 = arith.constant 0 : index
    %47 = vector.load %arg21[%c0_43, %c2, %c0_44] : memref<2x20x32xf32, #tpu.memory_space<vmem>>, vector<2x16x16xf32>
    %48 = vector.shape_cast %47 : vector<2x16x16xf32> to vector<32x16xf32>
    %c0_45 = arith.constant 0 : index
    %c0_46 = arith.constant 0 : index
    %49 = vector.load %arg8[%c0_45, %c0_46] : memref<32x16xf32, #tpu.memory_space<vmem>>, vector<16x16xf32>
    %cst_47 = arith.constant dense<0.000000e+00> : vector<32x16xf32>
    %50 = tpu.matmul %48, %49, %cst_47 {dimension_numbers = #tpu.dot_dimension_numbers<[1], [0], [0], [1], [0, 0, 1, 1], [], []>} : vector<32x16xf32>, vector<16x16xf32>, vector<32x16xf32> -> vector<32x16xf32>
    %51 = arith.addf %46, %50 : vector<32x16xf32>
    %c16_48 = arith.constant 16 : index
    %c0_49 = arith.constant 0 : index
    %52 = vector.load %arg8[%c16_48, %c0_49] : memref<32x16xf32, #tpu.memory_space<vmem>>, vector<16x16xf32>
    %cst_50 = arith.constant dense<0.000000e+00> : vector<32x16xf32>
    %53 = tpu.matmul %43, %52, %cst_50 {dimension_numbers = #tpu.dot_dimension_numbers<[1], [0], [0], [1], [0, 0, 1, 1], [], []>} : vector<32x16xf32>, vector<16x16xf32>, vector<32x16xf32> -> vector<32x16xf32>
    %54 = arith.addf %51, %53 : vector<32x16xf32>
    %c0_51 = arith.constant 0 : index
    %c0_52 = arith.constant 0 : index
    %55 = vector.load %arg9[%c0_51, %c0_52] : memref<1x16xf32, #tpu.memory_space<vmem>>, vector<1x16xf32>
    %56 = vector.broadcast %55 : vector<1x16xf32> to vector<32x16xf32>
    %57 = arith.addf %54, %56 : vector<32x16xf32>
    %cst_53 = arith.constant 0.000000e+00 : f32
    %58 = vector.broadcast %cst_53 : f32 to vector<32x16xf32>
    %59 = arith.maximumf %57, %58 : vector<32x16xf32>
    %60 = vector.shape_cast %59 : vector<32x16xf32> to vector<2x16x16xf32>
    %c0_54 = arith.constant 0 : index
    %c4_55 = arith.constant 4 : index
    %c0_56 = arith.constant 0 : index
    %61 = vector.load %arg21[%c0_54, %c4_55, %c0_56] : memref<2x20x32xf32, #tpu.memory_space<vmem>>, vector<2x16x16xf32>
    tpu.vector_store %arg21[%c0_54, %c4_55, %c0_56], %60 {strides = array<i32>} : memref<2x20x32xf32, #tpu.memory_space<vmem>>, vector<2x16x16xf32>,
    %cst_57 = arith.constant 0.000000e+00 : f32
    %62 = vector.broadcast %cst_57 : f32 to vector<32x16xf32>
    %c0_58 = arith.constant 0 : index
    %c2_59 = arith.constant 2 : index
    %c0_60 = arith.constant 0 : index
    %63 = vector.load %arg21[%c0_58, %c2_59, %c0_60] : memref<2x20x32xf32, #tpu.memory_space<vmem>>, vector<2x16x16xf32>
    %64 = vector.shape_cast %63 : vector<2x16x16xf32> to vector<32x16xf32>
    %c0_61 = arith.constant 0 : index
    %c0_62 = arith.constant 0 : index
    %65 = vector.load %arg10[%c0_61, %c0_62] : memref<32x16xf32, #tpu.memory_space<vmem>>, vector<16x16xf32>
    %cst_63 = arith.constant dense<0.000000e+00> : vector<32x16xf32>
    %66 = tpu.matmul %64, %65, %cst_63 {dimension_numbers = #tpu.dot_dimension_numbers<[1], [0], [0], [1], [0, 0, 1, 1], [], []>} : vector<32x16xf32>, vector<16x16xf32>, vector<32x16xf32> -> vector<32x16xf32>
    %67 = arith.addf %62, %66 : vector<32x16xf32>
    %c16_64 = arith.constant 16 : index
    %c0_65 = arith.constant 0 : index
    %68 = vector.load %arg10[%c16_64, %c0_65] : memref<32x16xf32, #tpu.memory_space<vmem>>, vector<16x16xf32>
    %cst_66 = arith.constant dense<0.000000e+00> : vector<32x16xf32>
    %69 = tpu.matmul %59, %68, %cst_66 {dimension_numbers = #tpu.dot_dimension_numbers<[1], [0], [0], [1], [0, 0, 1, 1], [], []>} : vector<32x16xf32>, vector<16x16xf32>, vector<32x16xf32> -> vector<32x16xf32>
    %70 = arith.addf %67, %69 : vector<32x16xf32>
    %c0_67 = arith.constant 0 : index
    %c0_68 = arith.constant 0 : index
    %71 = vector.load %arg11[%c0_67, %c0_68] : memref<1x16xf32, #tpu.memory_space<vmem>>, vector<1x16xf32>
    %72 = vector.broadcast %71 : vector<1x16xf32> to vector<32x16xf32>
    %73 = arith.addf %70, %72 : vector<32x16xf32>
    %cst_69 = arith.constant 0.000000e+00 : f32
    %74 = vector.broadcast %cst_69 : f32 to vector<32x16xf32>
    %75 = arith.maximumf %73, %74 : vector<32x16xf32>
    %76 = arith.addf %75, %43 : vector<32x16xf32>
    %cst_70 = arith.constant 0.000000e+00 : f32
    %77 = vector.broadcast %cst_70 : f32 to vector<32x16xf32>
    %78 = arith.maximumf %76, %77 : vector<32x16xf32>
    %79 = vector.shape_cast %78 : vector<32x16xf32> to vector<2x16x16xf32>
    %c0_71 = arith.constant 0 : index
    %c4_72 = arith.constant 4 : index
    %c0_73 = arith.constant 0 : index
    %80 = vector.load %arg21[%c0_71, %c4_72, %c0_73] : memref<2x20x32xf32, #tpu.memory_space<vmem>>, vector<2x16x16xf32>
    tpu.vector_store %arg21[%c0_71, %c4_72, %c0_73], %79 {strides = array<i32>} : memref<2x20x32xf32, #tpu.memory_space<vmem>>, vector<2x16x16xf32>,
    %cst_74 = arith.constant 0.000000e+00 : f32
    %81 = vector.broadcast %cst_74 : f32 to vector<32x32xf32>
    %c0_75 = arith.constant 0 : index
    %c0_76 = arith.constant 0 : index
    %c0_77 = arith.constant 0 : index
    %82 = vector.load %arg21[%c0_75, %c0_76, %c0_77] : memref<2x20x32xf32, #tpu.memory_space<vmem>>, vector<2x16x16xf32>
    %83 = vector.shape_cast %82 : vector<2x16x16xf32> to vector<32x16xf32>
    %c0_78 = arith.constant 0 : index
    %c0_79 = arith.constant 0 : index
    %84 = vector.load %arg12[%c0_78, %c0_79] : memref<32x32xf32, #tpu.memory_space<vmem>>, vector<16x32xf32>
    %cst_80 = arith.constant dense<0.000000e+00> : vector<32x32xf32>
    %85 = tpu.matmul %83, %84, %cst_80 {dimension_numbers = #tpu.dot_dimension_numbers<[1], [0], [0], [1], [0, 0, 1, 1], [], []>} : vector<32x16xf32>, vector<16x32xf32>, vector<32x32xf32> -> vector<32x32xf32>
    %86 = arith.addf %81, %85 : vector<32x32xf32>
    %c16_81 = arith.constant 16 : index
    %c0_82 = arith.constant 0 : index
    %87 = vector.load %arg12[%c16_81, %c0_82] : memref<32x32xf32, #tpu.memory_space<vmem>>, vector<16x32xf32>
    %cst_83 = arith.constant dense<0.000000e+00> : vector<32x32xf32>
    %88 = tpu.matmul %78, %87, %cst_83 {dimension_numbers = #tpu.dot_dimension_numbers<[1], [0], [0], [1], [0, 0, 1, 1], [], []>} : vector<32x16xf32>, vector<16x32xf32>, vector<32x32xf32> -> vector<32x32xf32>
    %89 = arith.addf %86, %88 : vector<32x32xf32>
    %c0_84 = arith.constant 0 : index
    %c0_85 = arith.constant 0 : index
    %90 = vector.load %arg13[%c0_84, %c0_85] : memref<1x32xf32, #tpu.memory_space<vmem>>, vector<1x32xf32>
    %91 = vector.broadcast %90 : vector<1x32xf32> to vector<32x32xf32>
    %92 = arith.addf %89, %91 : vector<32x32xf32>
    %cst_86 = arith.constant 0.000000e+00 : f32
    %93 = vector.broadcast %cst_86 : f32 to vector<32x32xf32>
    %94 = arith.maximumf %92, %93 : vector<32x32xf32>
    %95 = vector.shape_cast %94 : vector<32x32xf32> to vector<2x16x32xf32>
    %c0_87 = arith.constant 0 : index
    %c4_88 = arith.constant 4 : index
    %c0_89 = arith.constant 0 : index
    %96 = vector.load %arg21[%c0_87, %c4_88, %c0_89] : memref<2x20x32xf32, #tpu.memory_space<vmem>>, vector<2x16x32xf32>
    tpu.vector_store %arg21[%c0_87, %c4_88, %c0_89], %95 {strides = array<i32>} : memref<2x20x32xf32, #tpu.memory_space<vmem>>, vector<2x16x32xf32>,
    %cst_90 = arith.constant 0.000000e+00 : f32
    %97 = vector.broadcast %cst_90 : f32 to vector<32x32xf32>
    %c0_91 = arith.constant 0 : index
    %c0_92 = arith.constant 0 : index
    %c0_93 = arith.constant 0 : index
    %98 = vector.load %arg21[%c0_91, %c0_92, %c0_93] : memref<2x20x32xf32, #tpu.memory_space<vmem>>, vector<2x16x32xf32>
    %99 = vector.shape_cast %98 : vector<2x16x32xf32> to vector<32x32xf32>
    %c0_94 = arith.constant 0 : index
    %c0_95 = arith.constant 0 : index
    %100 = vector.load %arg14[%c0_94, %c0_95] : memref<64x32xf32, #tpu.memory_space<vmem>>, vector<32x32xf32>
    %cst_96 = arith.constant dense<0.000000e+00> : vector<32x32xf32>
    %101 = tpu.matmul %99, %100, %cst_96 {dimension_numbers = #tpu.dot_dimension_numbers<[1], [0], [0], [1], [0, 0, 1, 1], [], []>} : vector<32x32xf32>, vector<32x32xf32>, vector<32x32xf32> -> vector<32x32xf32>
    %102 = arith.addf %97, %101 : vector<32x32xf32>
    %c32 = arith.constant 32 : index
    %c0_97 = arith.constant 0 : index
    %103 = vector.load %arg14[%c32, %c0_97] : memref<64x32xf32, #tpu.memory_space<vmem>>, vector<32x32xf32>
    %cst_98 = arith.constant dense<0.000000e+00> : vector<32x32xf32>
    %104 = tpu.matmul %94, %103, %cst_98 {dimension_numbers = #tpu.dot_dimension_numbers<[1], [0], [0], [1], [0, 0, 1, 1], [], []>} : vector<32x32xf32>, vector<32x32xf32>, vector<32x32xf32> -> vector<32x32xf32>
    %105 = arith.addf %102, %104 : vector<32x32xf32>
    %c0_99 = arith.constant 0 : index
    %c0_100 = arith.constant 0 : index
    %106 = vector.load %arg15[%c0_99, %c0_100] : memref<1x32xf32, #tpu.memory_space<vmem>>, vector<1x32xf32>
    %107 = vector.broadcast %106 : vector<1x32xf32> to vector<32x32xf32>
    %108 = arith.addf %105, %107 : vector<32x32xf32>
    %cst_101 = arith.constant 0.000000e+00 : f32
    %109 = vector.broadcast %cst_101 : f32 to vector<32x32xf32>
    %110 = arith.maximumf %108, %109 : vector<32x32xf32>
    %c0_102 = arith.constant 0 : index
    %c0_103 = arith.constant 0 : index
    %111 = vector.load %arg16[%c0_102, %c0_103] : memref<16x32xf32, #tpu.memory_space<vmem>>, vector<16x32xf32>
    %cst_104 = arith.constant dense<0.000000e+00> : vector<32x32xf32>
    %112 = tpu.matmul %78, %111, %cst_104 {dimension_numbers = #tpu.dot_dimension_numbers<[1], [0], [0], [1], [0, 0, 1, 1], [], []>} : vector<32x16xf32>, vector<16x32xf32>, vector<32x32xf32> -> vector<32x32xf32>
    %c0_105 = arith.constant 0 : index
    %c0_106 = arith.constant 0 : index
    %113 = vector.load %arg17[%c0_105, %c0_106] : memref<1x32xf32, #tpu.memory_space<vmem>>, vector<1x32xf32>
    %114 = vector.broadcast %113 : vector<1x32xf32> to vector<32x32xf32>
    %115 = arith.addf %112, %114 : vector<32x32xf32>
    %116 = arith.addf %110, %115 : vector<32x32xf32>
    %cst_107 = arith.constant 0.000000e+00 : f32
    %117 = vector.broadcast %cst_107 : f32 to vector<32x32xf32>
    %118 = arith.maximumf %116, %117 : vector<32x32xf32>
    %119 = vector.shape_cast %118 : vector<32x32xf32> to vector<2x16x32xf32>
    %120 = vector.extract_strided_slice %119 {offsets = [0, 15, 0], sizes = [2, 1, 32], strides = [1, 1, 1]} : vector<2x16x32xf32> to vector<2x1x32xf32>
    %121 = vector.shape_cast %120 : vector<2x1x32xf32> to vector<2x32xf32>
    %c0_108 = arith.constant 0 : index
    %c0_109 = arith.constant 0 : index
    %122 = vector.load %arg18[%c0_108, %c0_109] : memref<32x12xf32, #tpu.memory_space<vmem>>, vector<32x12xf32>
    %cst_110 = arith.constant dense<0.000000e+00> : vector<2x12xf32>
    %123 = tpu.matmul %121, %122, %cst_110 {dimension_numbers = #tpu.dot_dimension_numbers<[1], [0], [0], [1], [0, 0, 1, 1], [], []>} : vector<2x32xf32>, vector<32x12xf32>, vector<2x12xf32> -> vector<2x12xf32>
    %c0_111 = arith.constant 0 : index
    %c0_112 = arith.constant 0 : index
    %124 = vector.load %arg19[%c0_111, %c0_112] : memref<1x12xf32, #tpu.memory_space<vmem>>, vector<1x12xf32>
    %125 = vector.broadcast %124 : vector<1x12xf32> to vector<2x12xf32>
    %126 = arith.addf %123, %125 : vector<2x12xf32>
    %c0_113 = arith.constant 0 : index
    %c0_114 = arith.constant 0 : index
    %127 = vector.load %arg20[%c0_113, %c0_114] : memref<2x12xf32, #tpu.memory_space<vmem>>, vector<2x12xf32>
    tpu.vector_store %arg20[%c0_113, %c0_114], %126 {strides = array<i32>} : memref<2x12xf32, #tpu.memory_space<vmem>>, vector<2x12xf32>,
    return
  }
  func.func @transform_0(%arg0: i32) -> (i32, i32, i32) {
    %c0_i32 = arith.constant 0 : i32
    %c0_i32_0 = arith.constant 0 : i32
    %c0_i32_1 = arith.constant 0 : i32
    return %arg0, %c0_i32, %c0_i32_0 : i32, i32, i32
  }
  func.func @transform_1(%arg0: i32) -> (i32, i32) {
    %c0_i32 = arith.constant 0 : i32
    %c0_i32_0 = arith.constant 0 : i32
    %c0_i32_1 = arith.constant 0 : i32
    return %c0_i32, %c0_i32_0 : i32, i32
  }
  func.func @transform_2(%arg0: i32) -> (i32, i32) {
    %c0_i32 = arith.constant 0 : i32
    %c0_i32_0 = arith.constant 0 : i32
    %c0_i32_1 = arith.constant 0 : i32
    return %c0_i32, %c0_i32_0 : i32, i32
  }
  func.func @transform_3(%arg0: i32) -> (i32, i32) {
    %c0_i32 = arith.constant 0 : i32
    %c0_i32_0 = arith.constant 0 : i32
    %c0_i32_1 = arith.constant 0 : i32
    return %c0_i32, %c0_i32_0 : i32, i32
  }
  func.func @transform_4(%arg0: i32) -> (i32, i32) {
    %c0_i32 = arith.constant 0 : i32
    %c0_i32_0 = arith.constant 0 : i32
    %c0_i32_1 = arith.constant 0 : i32
    return %c0_i32, %c0_i32_0 : i32, i32
  }
  func.func @transform_5(%arg0: i32) -> (i32, i32) {
    %c0_i32 = arith.constant 0 : i32
    %c0_i32_0 = arith.constant 0 : i32
    %c0_i32_1 = arith.constant 0 : i32
    return %c0_i32, %c0_i32_0 : i32, i32
  }
  func.func @transform_6(%arg0: i32) -> (i32, i32) {
    %c0_i32 = arith.constant 0 : i32
    %c0_i32_0 = arith.constant 0 : i32
    %c0_i32_1 = arith.constant 0 : i32
    return %c0_i32, %c0_i32_0 : i32, i32
  }
  func.func @transform_7(%arg0: i32) -> (i32, i32) {
    %c0_i32 = arith.constant 0 : i32
    %c0_i32_0 = arith.constant 0 : i32
    %c0_i32_1 = arith.constant 0 : i32
    return %c0_i32, %c0_i32_0 : i32, i32
  }
  func.func @transform_8(%arg0: i32) -> (i32, i32) {
    %c0_i32 = arith.constant 0 : i32
    %c0_i32_0 = arith.constant 0 : i32
    %c0_i32_1 = arith.constant 0 : i32
    return %c0_i32, %c0_i32_0 : i32, i32
  }
  func.func @transform_9(%arg0: i32) -> (i32, i32) {
    %c0_i32 = arith.constant 0 : i32
    %c0_i32_0 = arith.constant 0 : i32
    %c0_i32_1 = arith.constant 0 : i32
    return %c0_i32, %c0_i32_0 : i32, i32
  }
  func.func @transform_10(%arg0: i32) -> (i32, i32) {
    %c0_i32 = arith.constant 0 : i32
    %c0_i32_0 = arith.constant 0 : i32
    %c0_i32_1 = arith.constant 0 : i32
    return %c0_i32, %c0_i32_0 : i32, i32
  }
  func.func @transform_11(%arg0: i32) -> (i32, i32) {
    %c0_i32 = arith.constant 0 : i32
    %c0_i32_0 = arith.constant 0 : i32
    %c0_i32_1 = arith.constant 0 : i32
    return %c0_i32, %c0_i32_0 : i32, i32
  }
  func.func @transform_12(%arg0: i32) -> (i32, i32) {
    %c0_i32 = arith.constant 0 : i32
    %c0_i32_0 = arith.constant 0 : i32
    %c0_i32_1 = arith.constant 0 : i32
    return %c0_i32, %c0_i32_0 : i32, i32
  }
  func.func @transform_13(%arg0: i32) -> (i32, i32) {
    %c0_i32 = arith.constant 0 : i32
    %c0_i32_0 = arith.constant 0 : i32
    %c0_i32_1 = arith.constant 0 : i32
    return %c0_i32, %c0_i32_0 : i32, i32
  }
  func.func @transform_14(%arg0: i32) -> (i32, i32) {
    %c0_i32 = arith.constant 0 : i32
    %c0_i32_0 = arith.constant 0 : i32
    %c0_i32_1 = arith.constant 0 : i32
    return %c0_i32, %c0_i32_0 : i32, i32
  }
  func.func @transform_15(%arg0: i32) -> (i32, i32) {
    %c0_i32 = arith.constant 0 : i32
    %c0_i32_0 = arith.constant 0 : i32
    %c0_i32_1 = arith.constant 0 : i32
    return %c0_i32, %c0_i32_0 : i32, i32
  }
  func.func @transform_16(%arg0: i32) -> (i32, i32) {
    %c0_i32 = arith.constant 0 : i32
    %c0_i32_0 = arith.constant 0 : i32
    %c0_i32_1 = arith.constant 0 : i32
    return %c0_i32, %c0_i32_0 : i32, i32
  }
  func.func @transform_17(%arg0: i32) -> (i32, i32) {
    %c0_i32 = arith.constant 0 : i32
    %c0_i32_0 = arith.constant 0 : i32
    %c0_i32_1 = arith.constant 0 : i32
    return %c0_i32, %c0_i32_0 : i32, i32
  }
  func.func @transform_18(%arg0: i32) -> (i32, i32) {
    %c0_i32 = arith.constant 0 : i32
    %c0_i32_0 = arith.constant 0 : i32
    %c0_i32_1 = arith.constant 0 : i32
    return %c0_i32, %c0_i32_0 : i32, i32
  }
  func.func @transform_19(%arg0: i32) -> (i32, i32) {
    %c0_i32 = arith.constant 0 : i32
    %c0_i32_0 = arith.constant 0 : i32
    return %arg0, %c0_i32 : i32, i32
  }
}

</mosaic_0001>

<llo_original>
// kernel: forward.1
$region0: #{forward.1}
  #allocation0 [shape = 'u32[]', space=smem, size = 0x4, offset = 0x4, fixed_abs, tag = 'smem constant byte address 0x4 - core index']
  #allocation1 [shape = 'u32[144,128]{1,0:T(1,128)}', space=vmem, size = 0x12000, scoped, tag = 'internal scratch']
  #allocation2 [shape = 'f32[2,20,32]{2,1,0:T(8,128)}', space=vmem, size = 0x6000, scoped, tag = 'scratch operand']
  %s0 = inlined_call_operand.vmem [shape: f32[2,16,8], index: 0, kind: input, shape index: {}]
  %s1 = inlined_call_operand.vmem [shape: f32[16,16], index: 1, kind: input, shape index: {}]
  %s2 = inlined_call_operand.vmem [shape: f32[1,16], index: 2, kind: input, shape index: {}]
  %s3 = inlined_call_operand.vmem [shape: f32[32,16], index: 3, kind: input, shape index: {}]
  %s4 = inlined_call_operand.vmem [shape: f32[1,16], index: 4, kind: input, shape index: {}]
  %s5 = inlined_call_operand.vmem [shape: f32[8,16], index: 5, kind: input, shape index: {}]
  %s6 = inlined_call_operand.vmem [shape: f32[1,16], index: 6, kind: input, shape index: {}]
  %s7 = inlined_call_operand.vmem [shape: f32[32,16], index: 7, kind: input, shape index: {}]
  %s8 = inlined_call_operand.vmem [shape: f32[1,16], index: 8, kind: input, shape index: {}]
  %s9 = inlined_call_operand.vmem [shape: f32[32,16], index: 9, kind: input, shape index: {}]
  %s10 = inlined_call_operand.vmem [shape: f32[1,16], index: 10, kind: input, shape index: {}]
  %s11 = inlined_call_operand.vmem [shape: f32[32,32], index: 11, kind: input, shape index: {}]
  %s12 = inlined_call_operand.vmem [shape: f32[1,32], index: 12, kind: input, shape index: {}]
  %s13 = inlined_call_operand.vmem [shape: f32[64,32], index: 13, kind: input, shape index: {}]
  %s14 = inlined_call_operand.vmem [shape: f32[1,32], index: 14, kind: input, shape index: {}]
  %s15 = inlined_call_operand.vmem [shape: f32[16,32], index: 15, kind: input, shape index: {}]
  %s16 = inlined_call_operand.vmem [shape: f32[1,32], index: 16, kind: input, shape index: {}]
  %s17 = inlined_call_operand.vmem [shape: f32[32,12], index: 17, kind: input, shape index: {}]
  %s18 = inlined_call_operand.vmem [shape: f32[1,12], index: 18, kind: input, shape index: {}]
  %s19 = inlined_call_operand.vmem [shape: f32[2,12], index: 19, kind: output, shape index: {}]
  %s20 = sld [smem:[#allocation0]]
  $region86: #{forward.1} parent=0
    _
  %s22 = ssub.s32 1, %s20
  %s23 = scalar_select 0, %s22, %s20
  // Predicated region
  $region2: #{forward.1} parent=0 // pred_check
    _
  $region3: #{forward.1} parent=0 // pred_check_branch
    %25 = sbr.rel (0) target = $region5
  $region4: #{forward.1} parent=0 // pred_region
    _
  $region5: #{forward.1} parent=0 // pred_fallthru
    _
  // Predicated region
  $region6: #{forward.1} parent=0 // pred_check
    _
  $region7: #{forward.1} parent=0 // pred_check_branch
    %27 = sbr.rel (0) target = $region9
  $region8: #{forward.1} parent=0 // pred_region
    _
  $region9: #{forward.1} parent=0 // pred_fallthru
    _
  // Predicated region
  $region10: #{forward.1} parent=0 // pred_check
    _
  $region11: #{forward.1} parent=0 // pred_check_branch
    %29 = sbr.rel (0) target = $region13
  $region12: #{forward.1} parent=0 // pred_region
    _
  $region13: #{forward.1} parent=0 // pred_fallthru
    _
  // Predicated region
  $region14: #{forward.1} parent=0 // pred_check
    _
  $region15: #{forward.1} parent=0 // pred_check_branch
    %31 = sbr.rel (0) target = $region17
  $region16: #{forward.1} parent=0 // pred_region
    _
  $region17: #{forward.1} parent=0 // pred_fallthru
    _
  // Predicated region
  $region18: #{forward.1} parent=0 // pred_check
    _
  $region19: #{forward.1} parent=0 // pred_check_branch
    %33 = sbr.rel (0) target = $region21
  $region20: #{forward.1} parent=0 // pred_region
    _
  $region21: #{forward.1} parent=0 // pred_fallthru
    _
  // Predicated region
  $region22: #{forward.1} parent=0 // pred_check
    _
  $region23: #{forward.1} parent=0 // pred_check_branch
    %35 = sbr.rel (0) target = $region25
  $region24: #{forward.1} parent=0 // pred_region
    _
  $region25: #{forward.1} parent=0 // pred_fallthru
    _
  // Predicated region
  $region26: #{forward.1} parent=0 // pred_check
    _
  $region27: #{forward.1} parent=0 // pred_check_branch
    %37 = sbr.rel (0) target = $region29
  $region28: #{forward.1} parent=0 // pred_region
    _
  $region29: #{forward.1} parent=0 // pred_fallthru
    _
  // Predicated region
  $region30: #{forward.1} parent=0 // pred_check
    _
  $region31: #{forward.1} parent=0 // pred_check_branch
    %39 = sbr.rel (0) target = $region33
  $region32: #{forward.1} parent=0 // pred_region
    _
  $region33: #{forward.1} parent=0 // pred_fallthru
    _
  // Predicated region
  $region34: #{forward.1} parent=0 // pred_check
    _
  $region35: #{forward.1} parent=0 // pred_check_branch
    %41 = sbr.rel (0) target = $region37
  $region36: #{forward.1} parent=0 // pred_region
    _
  $region37: #{forward.1} parent=0 // pred_fallthru
    _
  // Predicated region
  $region38: #{forward.1} parent=0 // pred_check
    _
  $region39: #{forward.1} parent=0 // pred_check_branch
    %43 = sbr.rel (0) target = $region41
  $region40: #{forward.1} parent=0 // pred_region
    _
  $region41: #{forward.1} parent=0 // pred_fallthru
    _
  // Predicated region
  $region42: #{forward.1} parent=0 // pred_check
    _
  $region43: #{forward.1} parent=0 // pred_check_branch
    %45 = sbr.rel (0) target = $region45
  $region44: #{forward.1} parent=0 // pred_region
    _
  $region45: #{forward.1} parent=0 // pred_fallthru
    _
  // Predicated region
  $region46: #{forward.1} parent=0 // pred_check
    _
  $region47: #{forward.1} parent=0 // pred_check_branch
    %47 = sbr.rel (0) target = $region49
  $region48: #{forward.1} parent=0 // pred_region
    _
  $region49: #{forward.1} parent=0 // pred_fallthru
    _
  // Predicated region
  $region50: #{forward.1} parent=0 // pred_check
    _
  $region51: #{forward.1} parent=0 // pred_check_branch
    %49 = sbr.rel (0) target = $region53
  $region52: #{forward.1} parent=0 // pred_region
    _
  $region53: #{forward.1} parent=0 // pred_fallthru
    _
  // Predicated region
  $region54: #{forward.1} parent=0 // pred_check
    _
  $region55: #{forward.1} parent=0 // pred_check_branch
    %51 = sbr.rel (0) target = $region57
  $region56: #{forward.1} parent=0 // pred_region
    _
  $region57: #{forward.1} parent=0 // pred_fallthru
    _
  // Predicated region
  $region58: #{forward.1} parent=0 // pred_check
    _
  $region59: #{forward.1} parent=0 // pred_check_branch
    %53 = sbr.rel (0) target = $region61
  $region60: #{forward.1} parent=0 // pred_region
    _
  $region61: #{forward.1} parent=0 // pred_fallthru
    _
  // Predicated region
  $region62: #{forward.1} parent=0 // pred_check
    _
  $region63: #{forward.1} parent=0 // pred_check_branch
    %55 = sbr.rel (0) target = $region65
  $region64: #{forward.1} parent=0 // pred_region
    _
  $region65: #{forward.1} parent=0 // pred_fallthru
    _
  // Predicated region
  $region66: #{forward.1} parent=0 // pred_check
    _
  $region67: #{forward.1} parent=0 // pred_check_branch
    %57 = sbr.rel (0) target = $region69
  $region68: #{forward.1} parent=0 // pred_region
    _
  $region69: #{forward.1} parent=0 // pred_fallthru
    _
  // Predicated region
  $region70: #{forward.1} parent=0 // pred_check
    _
  $region71: #{forward.1} parent=0 // pred_check_branch
    %59 = sbr.rel (0) target = $region73
  $region72: #{forward.1} parent=0 // pred_region
    _
  $region73: #{forward.1} parent=0 // pred_fallthru
    _
  // Predicated region
  $region74: #{forward.1} parent=0 // pred_check
    _
  $region75: #{forward.1} parent=0 // pred_check_branch
    %61 = sbr.rel (0) target = $region77
  $region76: #{forward.1} parent=0 // pred_region
    _
  $region77: #{forward.1} parent=0 // pred_fallthru
    _
  %vm62 = vcmask 257024
  %63 = vst.msk [vmem:[#allocation2] sm:$0xf] %vm62, 0.0
  %64 = vst.msk [vmem:[#allocation2 + $0x18] sm:$0xf] %vm62, 0.0
  %v65 = vld [vmem:[%s0] sm:$0xff]
  %v66 = vld [vmem:[%s0 + $0x8] sm:$0xff]
  %v67 = vld [vmem:[%s0 + $0x10] sm:$0xff]
  %v68 = vld [vmem:[%s0 + $0x18] sm:$0xff]
  %vm69 = vcmask 64512
  %70 = vst.msk [vmem:[#allocation2 + $0x4] sm:$0xff] %vm69, %v65
  %71 = vst.msk [vmem:[#allocation2 + $0xc] sm:$0xff] %vm69, %v66
  %72 = vst.msk [vmem:[#allocation2 + $0x1c] sm:$0xff] %vm69, %v67
  %73 = vst.msk [vmem:[#allocation2 + $0x24] sm:$0xff] %vm69, %v68
  %v74 = vld [vmem:[#allocation2 + $0x3] sm:$0xff]
  %v75 = vld [vmem:[#allocation2 + $0xb] sm:$0xff]
  %v76 = vld [vmem:[#allocation2 + $0x1b] sm:$0xff]
  %v77 = vld [vmem:[#allocation2 + $0x23] sm:$0xff]
  %v78 = vld [vmem:[%s1] sm:$0xff]
  %v79 = vld [vmem:[%s1 + $0x8] sm:$0xff]
  %v81 = vsel %vm69, %v65, 0
  %v84 = vsel %vm69, %v66, 0
  %v87 = vsel %vm69, %v67, 0
  %v90 = vsel %vm69, %v68, 0
  %92 = vmatprep.subr.mxu0 0.0
  %93 = vmatpush1.msra.mxu0 0.0
  %94 = vmatprep.subr.mxu0 0.0
  %95 = vmatpush1.msra.mxu0 0.0
  %96 = vmatprep.subr.mxu0 0.0
  %97 = vmatpush1.msra.mxu0 0.0
  %98 = vmatprep.subr.mxu0 0.0
  %99 = vmatpush1.msra.mxu0 0.0
  %100 = vmatprep.subr.mxu0 0.0
  %101 = vmatpush1.msra.mxu0 0.0
  %102 = vmatprep.subr.mxu0 0.0
  %103 = vmatpush1.msra.mxu0 0.0
  %104 = vmatprep.subr.mxu0 0.0
  %105 = vmatpush1.msra.mxu0 0.0
  %106 = vmatprep.subr.mxu0 0.0
  %107 = vmatpush1.msra.mxu0 0.0
  %108 = vmatprep.subr.mxu0 0.0
  %109 = vmatpush1.msra.mxu0 0.0
  %110 = vmatprep.subr.mxu0 0.0
  %111 = vmatpush1.msra.mxu0 0.0
  %112 = vmatprep.subr.mxu0 0.0
  %113 = vmatpush1.msra.mxu0 0.0
  %114 = vmatprep.subr.mxu0 0.0
  %115 = vmatpush1.msra.mxu0 0.0
  %116 = vmatprep.subr.mxu0 0.0
  %117 = vmatpush1.msra.mxu0 0.0
  %118 = vmatprep.subr.mxu0 0.0
  %119 = vmatpush1.msra.mxu0 0.0
  %120 = vmatprep.subr.mxu0 0.0
  %121 = vmatpush1.msra.mxu0 0.0
  %122 = vmatprep.subr.mxu0 0.0
  %123 = vmatpush1.msra.mxu0 %v79
  %124 = vmatprep.subr.mxu0 0.0
  %125 = vmatpush2.msra.mxu0 0.0
  %126 = vmatprep.subr.mxu0 0.0
  %127 = vmatpush2.msra.mxu0 0.0
  %128 = vmatprep.subr.mxu0 0.0
  %129 = vmatpush2.msra.mxu0 0.0
  %130 = vmatprep.subr.mxu0 0.0
  %131 = vmatpush2.msra.mxu0 0.0
  %132 = vmatprep.subr.mxu0 0.0
  %133 = vmatpush2.msra.mxu0 0.0
  %134 = vmatprep.subr.mxu0 0.0
  %135 = vmatpush2.msra.mxu0 0.0
  %136 = vmatprep.subr.mxu0 0.0
  %137 = vmatpush2.msra.mxu0 0.0
  %138 = vmatprep.subr.mxu0 0.0
  %139 = vmatpush2.msra.mxu0 0.0
  %140 = vmatprep.subr.mxu0 0.0
  %141 = vmatpush2.msra.mxu0 0.0
  %142 = vmatprep.subr.mxu0 0.0
  %143 = vmatpush2.msra.mxu0 0.0
  %144 = vmatprep.subr.mxu0 0.0
  %145 = vmatpush2.msra.mxu0 0.0
  %146 = vmatprep.subr.mxu0 0.0
  %147 = vmatpush2.msra.mxu0 0.0
  %148 = vmatprep.subr.mxu0 0.0
  %149 = vmatpush2.msra.mxu0 0.0
  %150 = vmatprep.subr.mxu0 0.0
  %151 = vmatpush2.msra.mxu0 0.0
  %152 = vmatprep.subr.mxu0 0.0
  %153 = vmatpush2.msra.mxu0 0.0
  %154 = vmatprep.subr.mxu0 0.0
  %155 = vmatpush2.msra.mxu0 0.0
  %156 = vmatprep.mubr.f32.mxu0 0.0
  %157 = vmatmul.mubr.f32.gmra.mxu0 %v81
  %v158 = vpop.f32.mrf.mxu0
  %v159 = vadd.f32 0.0, %v158
  %v160 = vpop.f32.mrf.mxu0
  %161 = vmatprep.mubr.f32.mxu0 0.0
  %162 = vmatmul.mubr.f32.gmra.mxu0 %v84
  %v163 = vpop.f32.mrf.mxu0
  %v164 = vadd.f32 0.0, %v163
  %v165 = vpop.f32.mrf.mxu0
  %166 = vmatprep.mubr.f32.mxu0 0.0
  %167 = vmatmul.mubr.f32.gmra.mxu0 %v87
  %v168 = vpop.f32.mrf.mxu0
  %v169 = vadd.f32 0.0, %v168
  %v170 = vpop.f32.mrf.mxu0
  %171 = vmatprep.mubr.f32.mxu0 0.0
  %172 = vmatmul.mubr.f32.gmra.mxu0 %v90
  %v173 = vpop.f32.mrf.mxu0
  %v174 = vadd.f32 0.0, %v173
  %v175 = vpop.f32.mrf.mxu0
  %176 = vdwg.mxu0
  %v178 = vsel %vm69, %v74, 0
  %v181 = vsel %vm69, %v75, 0
  %v184 = vsel %vm69, %v76, 0
  %v187 = vsel %vm69, %v77, 0
  %189 = vmatprep.subr.mxu0 0.0
  %190 = vmatpush1.msra.mxu0 0.0
  %191 = vmatprep.subr.mxu0 0.0
  %192 = vmatpush1.msra.mxu0 0.0
  %193 = vmatprep.subr.mxu0 0.0
  %194 = vmatpush1.msra.mxu0 0.0
  %195 = vmatprep.subr.mxu0 0.0
  %196 = vmatpush1.msra.mxu0 0.0
  %197 = vmatprep.subr.mxu0 0.0
  %198 = vmatpush1.msra.mxu0 0.0
  %199 = vmatprep.subr.mxu0 0.0
  %200 = vmatpush1.msra.mxu0 0.0
  %201 = vmatprep.subr.mxu0 0.0
  %202 = vmatpush1.msra.mxu0 0.0
  %203 = vmatprep.subr.mxu0 0.0
  %204 = vmatpush1.msra.mxu0 0.0
  %205 = vmatprep.subr.mxu0 0.0
  %206 = vmatpush1.msra.mxu0 0.0
  %207 = vmatprep.subr.mxu0 0.0
  %208 = vmatpush1.msra.mxu0 0.0
  %209 = vmatprep.subr.mxu0 0.0
  %210 = vmatpush1.msra.mxu0 0.0
  %211 = vmatprep.subr.mxu0 0.0
  %212 = vmatpush1.msra.mxu0 0.0
  %213 = vmatprep.subr.mxu0 0.0
  %214 = vmatpush1.msra.mxu0 0.0
  %215 = vmatprep.subr.mxu0 0.0
  %216 = vmatpush1.msra.mxu0 0.0
  %217 = vmatprep.subr.mxu0 0.0
  %218 = vmatpush1.msra.mxu0 0.0
  %219 = vmatprep.subr.mxu0 0.0
  %220 = vmatpush1.msra.mxu0 %v78
  %221 = vmatprep.subr.mxu0 0.0
  %222 = vmatpush2.msra.mxu0 0.0
  %223 = vmatprep.subr.mxu0 0.0
  %224 = vmatpush2.msra.mxu0 0.0
  %225 = vmatprep.subr.mxu0 0.0
  %226 = vmatpush2.msra.mxu0 0.0
  %227 = vmatprep.subr.mxu0 0.0
  %228 = vmatpush2.msra.mxu0 0.0
  %229 = vmatprep.subr.mxu0 0.0
  %230 = vmatpush2.msra.mxu0 0.0
  %231 = vmatprep.subr.mxu0 0.0
  %232 = vmatpush2.msra.mxu0 0.0
  %233 = vmatprep.subr.mxu0 0.0
  %234 = vmatpush2.msra.mxu0 0.0
  %235 = vmatprep.subr.mxu0 0.0
  %236 = vmatpush2.msra.mxu0 0.0
  %237 = vmatprep.subr.mxu0 0.0
  %238 = vmatpush2.msra.mxu0 0.0
  %239 = vmatprep.subr.mxu0 0.0
  %240 = vmatpush2.msra.mxu0 0.0
  %241 = vmatprep.subr.mxu0 0.0
  %242 = vmatpush2.msra.mxu0 0.0
  %243 = vmatprep.subr.mxu0 0.0
  %244 = vmatpush2.msra.mxu0 0.0
  %245 = vmatprep.subr.mxu0 0.0
  %246 = vmatpush2.msra.mxu0 0.0
  %247 = vmatprep.subr.mxu0 0.0
  %248 = vmatpush2.msra.mxu0 0.0
  %249 = vmatprep.subr.mxu0 0.0
  %250 = vmatpush2.msra.mxu0 0.0
  %251 = vmatprep.subr.mxu0 0.0
  %252 = vmatpush2.msra.mxu0 0.0
  %253 = vmatprep.mubr.f32.mxu0 0.0
  %254 = vmatmul.mubr.f32.gmra.mxu0 %v178
  %v255 = vpop.f32.mrf.mxu0
  %v256 = vadd.f32 %v159, %v255
  %v257 = vpop.f32.mrf.mxu0
  %258 = vmatprep.mubr.f32.mxu0 0.0
  %259 = vmatmul.mubr.f32.gmra.mxu0 %v181
  %v260 = vpop.f32.mrf.mxu0
  %v261 = vadd.f32 %v164, %v260
  %v262 = vpop.f32.mrf.mxu0
  %263 = vmatprep.mubr.f32.mxu0 0.0
  %264 = vmatmul.mubr.f32.gmra.mxu0 %v184
  %v265 = vpop.f32.mrf.mxu0
  %v266 = vadd.f32 %v169, %v265
  %v267 = vpop.f32.mrf.mxu0
  %268 = vmatprep.mubr.f32.mxu0 0.0
  %269 = vmatmul.mubr.f32.gmra.mxu0 %v187
  %v270 = vpop.f32.mrf.mxu0
  %v271 = vadd.f32 %v174, %v270
  %v272 = vpop.f32.mrf.mxu0
  %273 = vdwg.mxu0
  %v274 = vld [vmem:[%s2] sm:$0x1]
  %v276 = vlaneseq
  %v277 = vshrl.u32 %v276, 7
  %v278 = vsub.s32 0, %v277
  %v279 = vrot.slane %v274, %v278
  %v281 = vadd.f32 %v256, %v279
  %v282 = vadd.f32 %v261, %v279
  %v283 = vadd.f32 %v266, %v279
  %v284 = vadd.f32 %v271, %v279
  %v285 = vmax.f32 %v281, 0.0
  %v286 = vmax.f32 %v282, 0.0
  %v287 = vmax.f32 %v283, 0.0
  %v288 = vmax.f32 %v284, 0.0
  %vm289 = vcmask 130048
  %290 = vst.msk [vmem:[#allocation2 + $0x4] sm:$0xff] %vm289, %v285
  %291 = vst.msk [vmem:[#allocation2 + $0xc] sm:$0xff] %vm289, %v286
  %292 = vst.msk [vmem:[#allocation2 + $0x1c] sm:$0xff] %vm289, %v287
  %293 = vst.msk [vmem:[#allocation2 + $0x24] sm:$0xff] %vm289, %v288
  %v294 = vld [vmem:[#allocation2 + $0x3] sm:$0xff]
  %v295 = vld [vmem:[#allocation2 + $0xb] sm:$0xff]
  %v296 = vld [vmem:[#allocation2 + $0x1b] sm:$0xff]
  %v297 = vld [vmem:[#allocation2 + $0x23] sm:$0xff]
  %v298 = vld [vmem:[%s3] sm:$0xff]
  %v299 = vld [vmem:[%s3 + $0x8] sm:$0xff]
  %v300 = vld [vmem:[%s3 + $0x10] sm:$0xff]
  %v301 = vld [vmem:[%s3 + $0x18] sm:$0xff]
  %v303 = vsel %vm289, %v285, 0
  %v306 = vsel %vm289, %v286, 0
  %v309 = vsel %vm289, %v287, 0
  %v312 = vsel %vm289, %v288, 0
  %314 = vmatprep.subr.mxu0 0.0
  %315 = vmatpush1.msra.mxu0 0.0
  %316 = vmatprep.subr.mxu0 0.0
  %317 = vmatpush1.msra.mxu0 0.0
  %318 = vmatprep.subr.mxu0 0.0
  %319 = vmatpush1.msra.mxu0 0.0
  %320 = vmatprep.subr.mxu0 0.0
  %321 = vmatpush1.msra.mxu0 0.0
  %322 = vmatprep.subr.mxu0 0.0
  %323 = vmatpush1.msra.mxu0 0.0
  %324 = vmatprep.subr.mxu0 0.0
  %325 = vmatpush1.msra.mxu0 0.0
  %326 = vmatprep.subr.mxu0 0.0
  %327 = vmatpush1.msra.mxu0 0.0
  %328 = vmatprep.subr.mxu0 0.0
  %329 = vmatpush1.msra.mxu0 0.0
  %330 = vmatprep.subr.mxu0 0.0
  %331 = vmatpush1.msra.mxu0 0.0
  %332 = vmatprep.subr.mxu0 0.0
  %333 = vmatpush1.msra.mxu0 0.0
  %334 = vmatprep.subr.mxu0 0.0
  %335 = vmatpush1.msra.mxu0 0.0
  %336 = vmatprep.subr.mxu0 0.0
  %337 = vmatpush1.msra.mxu0 0.0
  %338 = vmatprep.subr.mxu0 0.0
  %339 = vmatpush1.msra.mxu0 0.0
  %340 = vmatprep.subr.mxu0 0.0
  %341 = vmatpush1.msra.mxu0 0.0
  %342 = vmatprep.subr.mxu0 0.0
  %343 = vmatpush1.msra.mxu0 %v301
  %344 = vmatprep.subr.mxu0 0.0
  %345 = vmatpush1.msra.mxu0 %v300
  %346 = vmatprep.subr.mxu0 0.0
  %347 = vmatpush2.msra.mxu0 0.0
  %348 = vmatprep.subr.mxu0 0.0
  %349 = vmatpush2.msra.mxu0 0.0
  %350 = vmatprep.subr.mxu0 0.0
  %351 = vmatpush2.msra.mxu0 0.0
  %352 = vmatprep.subr.mxu0 0.0
  %353 = vmatpush2.msra.mxu0 0.0
  %354 = vmatprep.subr.mxu0 0.0
  %355 = vmatpush2.msra.mxu0 0.0
  %356 = vmatprep.subr.mxu0 0.0
  %357 = vmatpush2.msra.mxu0 0.0
  %358 = vmatprep.subr.mxu0 0.0
  %359 = vmatpush2.msra.mxu0 0.0
  %360 = vmatprep.subr.mxu0 0.0
  %361 = vmatpush2.msra.mxu0 0.0
  %362 = vmatprep.subr.mxu0 0.0
  %363 = vmatpush2.msra.mxu0 0.0
  %364 = vmatprep.subr.mxu0 0.0
  %365 = vmatpush2.msra.mxu0 0.0
  %366 = vmatprep.subr.mxu0 0.0
  %367 = vmatpush2.msra.mxu0 0.0
  %368 = vmatprep.subr.mxu0 0.0
  %369 = vmatpush2.msra.mxu0 0.0
  %370 = vmatprep.subr.mxu0 0.0
  %371 = vmatpush2.msra.mxu0 0.0
  %372 = vmatprep.subr.mxu0 0.0
  %373 = vmatpush2.msra.mxu0 0.0
  %374 = vmatprep.subr.mxu0 0.0
  %375 = vmatpush2.msra.mxu0 0.0
  %376 = vmatprep.subr.mxu0 0.0
  %377 = vmatpush2.msra.mxu0 0.0
  %378 = vmatprep.mubr.f32.mxu0 0.0
  %379 = vmatmul.mubr.f32.gmra.mxu0 %v303
  %v380 = vpop.f32.mrf.mxu0
  %v381 = vadd.f32 0.0, %v380
  %v382 = vpop.f32.mrf.mxu0
  %383 = vmatprep.mubr.f32.mxu0 0.0
  %384 = vmatmul.mubr.f32.gmra.mxu0 %v306
  %v385 = vpop.f32.mrf.mxu0
  %v386 = vadd.f32 0.0, %v385
  %v387 = vpop.f32.mrf.mxu0
  %388 = vmatprep.mubr.f32.mxu0 0.0
  %389 = vmatmul.mubr.f32.gmra.mxu0 %v309
  %v390 = vpop.f32.mrf.mxu0
  %v391 = vadd.f32 0.0, %v390
  %v392 = vpop.f32.mrf.mxu0
  %393 = vmatprep.mubr.f32.mxu0 0.0
  %394 = vmatmul.mubr.f32.gmra.mxu0 %v312
  %v395 = vpop.f32.mrf.mxu0
  %v396 = vadd.f32 0.0, %v395
  %v397 = vpop.f32.mrf.mxu0
  %398 = vdwg.mxu0
  %v400 = vsel %vm289, %v294, 0
  %v403 = vsel %vm289, %v295, 0
  %v406 = vsel %vm289, %v296, 0
  %v409 = vsel %vm289, %v297, 0
  %411 = vmatprep.subr.mxu0 0.0
  %412 = vmatpush1.msra.mxu0 0.0
  %413 = vmatprep.subr.mxu0 0.0
  %414 = vmatpush1.msra.mxu0 0.0
  %415 = vmatprep.subr.mxu0 0.0
  %416 = vmatpush1.msra.mxu0 0.0
  %417 = vmatprep.subr.mxu0 0.0
  %418 = vmatpush1.msra.mxu0 0.0
  %419 = vmatprep.subr.mxu0 0.0
  %420 = vmatpush1.msra.mxu0 0.0
  %421 = vmatprep.subr.mxu0 0.0
  %422 = vmatpush1.msra.mxu0 0.0
  %423 = vmatprep.subr.mxu0 0.0
  %424 = vmatpush1.msra.mxu0 0.0
  %425 = vmatprep.subr.mxu0 0.0
  %426 = vmatpush1.msra.mxu0 0.0
  %427 = vmatprep.subr.mxu0 0.0
  %428 = vmatpush1.msra.mxu0 0.0
  %429 = vmatprep.subr.mxu0 0.0
  %430 = vmatpush1.msra.mxu0 0.0
  %431 = vmatprep.subr.mxu0 0.0
  %432 = vmatpush1.msra.mxu0 0.0
  %433 = vmatprep.subr.mxu0 0.0
  %434 = vmatpush1.msra.mxu0 0.0
  %435 = vmatprep.subr.mxu0 0.0
  %436 = vmatpush1.msra.mxu0 0.0
  %437 = vmatprep.subr.mxu0 0.0
  %438 = vmatpush1.msra.mxu0 0.0
  %439 = vmatprep.subr.mxu0 0.0
  %440 = vmatpush1.msra.mxu0 %v299
  %441 = vmatprep.subr.mxu0 0.0
  %442 = vmatpush1.msra.mxu0 %v298
  %443 = vmatprep.subr.mxu0 0.0
  %444 = vmatpush2.msra.mxu0 0.0
  %445 = vmatprep.subr.mxu0 0.0
  %446 = vmatpush2.msra.mxu0 0.0
  %447 = vmatprep.subr.mxu0 0.0
  %448 = vmatpush2.msra.mxu0 0.0
  %449 = vmatprep.subr.mxu0 0.0
  %450 = vmatpush2.msra.mxu0 0.0
  %451 = vmatprep.subr.mxu0 0.0
  %452 = vmatpush2.msra.mxu0 0.0
  %453 = vmatprep.subr.mxu0 0.0
  %454 = vmatpush2.msra.mxu0 0.0
  %455 = vmatprep.subr.mxu0 0.0
  %456 = vmatpush2.msra.mxu0 0.0
  %457 = vmatprep.subr.mxu0 0.0
  %458 = vmatpush2.msra.mxu0 0.0
  %459 = vmatprep.subr.mxu0 0.0
  %460 = vmatpush2.msra.mxu0 0.0
  %461 = vmatprep.subr.mxu0 0.0
  %462 = vmatpush2.msra.mxu0 0.0
  %463 = vmatprep.subr.mxu0 0.0
  %464 = vmatpush2.msra.mxu0 0.0
  %465 = vmatprep.subr.mxu0 0.0
  %466 = vmatpush2.msra.mxu0 0.0
  %467 = vmatprep.subr.mxu0 0.0
  %468 = vmatpush2.msra.mxu0 0.0
  %469 = vmatprep.subr.mxu0 0.0
  %470 = vmatpush2.msra.mxu0 0.0
  %471 = vmatprep.subr.mxu0 0.0
  %472 = vmatpush2.msra.mxu0 0.0
  %473 = vmatprep.subr.mxu0 0.0
  %474 = vmatpush2.msra.mxu0 0.0
  %475 = vmatprep.mubr.f32.mxu0 0.0
  %476 = vmatmul.mubr.f32.gmra.mxu0 %v400
  %v477 = vpop.f32.mrf.mxu0
  %v478 = vadd.f32 %v381, %v477
  %v479 = vpop.f32.mrf.mxu0
  %480 = vmatprep.mubr.f32.mxu0 0.0
  %481 = vmatmul.mubr.f32.gmra.mxu0 %v403
  %v482 = vpop.f32.mrf.mxu0
  %v483 = vadd.f32 %v386, %v482
  %v484 = vpop.f32.mrf.mxu0
  %485 = vmatprep.mubr.f32.mxu0 0.0
  %486 = vmatmul.mubr.f32.gmra.mxu0 %v406
  %v487 = vpop.f32.mrf.mxu0
  %v488 = vadd.f32 %v391, %v487
  %v489 = vpop.f32.mrf.mxu0
  %490 = vmatprep.mubr.f32.mxu0 0.0
  %491 = vmatmul.mubr.f32.gmra.mxu0 %v409
  %v492 = vpop.f32.mrf.mxu0
  %v493 = vadd.f32 %v396, %v492
  %v494 = vpop.f32.mrf.mxu0
  %495 = vdwg.mxu0
  %v496 = vld [vmem:[%s4] sm:$0x1]
  %v498 = vlaneseq
  %v499 = vshrl.u32 %v498, 7
  %v500 = vsub.s32 0, %v499
  %v501 = vrot.slane %v496, %v500
  %v503 = vadd.f32 %v478, %v501
  %v504 = vadd.f32 %v483, %v501
  %v505 = vadd.f32 %v488, %v501
  %v506 = vadd.f32 %v493, %v501
  %v507 = vmax.f32 %v503, 0.0
  %v508 = vmax.f32 %v504, 0.0
  %v509 = vmax.f32 %v505, 0.0
  %v510 = vmax.f32 %v506, 0.0
  %v511 = vld [vmem:[%s5] sm:$0xff]
  %v512 = vld [vmem:[%s6] sm:$0x1]
  %v514 = vlaneseq
  %v515 = vshrl.u32 %v514, 7
  %v516 = vsub.s32 0, %v515
  %v517 = vrot.slane %v512, %v516
  %519 = vmatprep.subr.mxu0 0.0
  %520 = vmatpush1.msra.mxu0 0.0
  %521 = vmatprep.subr.mxu0 0.0
  %522 = vmatpush1.msra.mxu0 0.0
  %523 = vmatprep.subr.mxu0 0.0
  %524 = vmatpush1.msra.mxu0 0.0
  %525 = vmatprep.subr.mxu0 0.0
  %526 = vmatpush1.msra.mxu0 0.0
  %527 = vmatprep.subr.mxu0 0.0
  %528 = vmatpush1.msra.mxu0 0.0
  %529 = vmatprep.subr.mxu0 0.0
  %530 = vmatpush1.msra.mxu0 0.0
  %531 = vmatprep.subr.mxu0 0.0
  %532 = vmatpush1.msra.mxu0 0.0
  %533 = vmatprep.subr.mxu0 0.0
  %534 = vmatpush1.msra.mxu0 0.0
  %535 = vmatprep.subr.mxu0 0.0
  %536 = vmatpush1.msra.mxu0 0.0
  %537 = vmatprep.subr.mxu0 0.0
  %538 = vmatpush1.msra.mxu0 0.0
  %539 = vmatprep.subr.mxu0 0.0
  %540 = vmatpush1.msra.mxu0 0.0
  %541 = vmatprep.subr.mxu0 0.0
  %542 = vmatpush1.msra.mxu0 0.0
  %543 = vmatprep.subr.mxu0 0.0
  %544 = vmatpush1.msra.mxu0 0.0
  %545 = vmatprep.subr.mxu0 0.0
  %546 = vmatpush1.msra.mxu0 0.0
  %547 = vmatprep.subr.mxu0 0.0
  %548 = vmatpush1.msra.mxu0 0.0
  %549 = vmatprep.subr.mxu0 0.0
  %550 = vmatpush1.msra.mxu0 %v511
  %551 = vmatprep.subr.mxu0 0.0
  %552 = vmatpush2.msra.mxu0 0.0
  %553 = vmatprep.subr.mxu0 0.0
  %554 = vmatpush2.msra.mxu0 0.0
  %555 = vmatprep.subr.mxu0 0.0
  %556 = vmatpush2.msra.mxu0 0.0
  %557 = vmatprep.subr.mxu0 0.0
  %558 = vmatpush2.msra.mxu0 0.0
  %559 = vmatprep.subr.mxu0 0.0
  %560 = vmatpush2.msra.mxu0 0.0
  %561 = vmatprep.subr.mxu0 0.0
  %562 = vmatpush2.msra.mxu0 0.0
  %563 = vmatprep.subr.mxu0 0.0
  %564 = vmatpush2.msra.mxu0 0.0
  %565 = vmatprep.subr.mxu0 0.0
  %566 = vmatpush2.msra.mxu0 0.0
  %567 = vmatprep.subr.mxu0 0.0
  %568 = vmatpush2.msra.mxu0 0.0
  %569 = vmatprep.subr.mxu0 0.0
  %570 = vmatpush2.msra.mxu0 0.0
  %571 = vmatprep.subr.mxu0 0.0
  %572 = vmatpush2.msra.mxu0 0.0
  %573 = vmatprep.subr.mxu0 0.0
  %574 = vmatpush2.msra.mxu0 0.0
  %575 = vmatprep.subr.mxu0 0.0
  %576 = vmatpush2.msra.mxu0 0.0
  %577 = vmatprep.subr.mxu0 0.0
  %578 = vmatpush2.msra.mxu0 0.0
  %579 = vmatprep.subr.mxu0 0.0
  %580 = vmatpush2.msra.mxu0 0.0
  %581 = vmatprep.subr.mxu0 0.0
  %582 = vmatpush2.msra.mxu0 0.0
  %583 = vmatprep.mubr.f32.mxu0 0.0
  %584 = vmatmul.mubr.f32.gmra.mxu0 %v81
  %v585 = vpop.f32.mrf.mxu0
  %v586 = vadd.f32 %v517, %v585
  %v587 = vpop.f32.mrf.mxu0
  %588 = vmatprep.mubr.f32.mxu0 0.0
  %589 = vmatmul.mubr.f32.gmra.mxu0 %v84
  %v590 = vpop.f32.mrf.mxu0
  %v591 = vadd.f32 %v517, %v590
  %v592 = vpop.f32.mrf.mxu0
  %593 = vmatprep.mubr.f32.mxu0 0.0
  %594 = vmatmul.mubr.f32.gmra.mxu0 %v87
  %v595 = vpop.f32.mrf.mxu0
  %v596 = vadd.f32 %v517, %v595
  %v597 = vpop.f32.mrf.mxu0
  %598 = vmatprep.mubr.f32.mxu0 0.0
  %599 = vmatmul.mubr.f32.gmra.mxu0 %v90
  %v600 = vpop.f32.mrf.mxu0
  %v601 = vadd.f32 %v517, %v600
  %v602 = vpop.f32.mrf.mxu0
  %603 = vdwg.mxu0
  %v604 = vadd.f32 %v507, %v586
  %v605 = vadd.f32 %v508, %v591
  %v606 = vadd.f32 %v509, %v596
  %v607 = vadd.f32 %v510, %v601
  %v608 = vmax.f32 %v604, 0.0
  %v609 = vmax.f32 %v605, 0.0
  %v610 = vmax.f32 %v606, 0.0
  %v611 = vmax.f32 %v607, 0.0
  %612 = vst.msk [vmem:[#allocation2 + $0x4] sm:$0xff] %vm289, %v608
  %613 = vst.msk [vmem:[#allocation2 + $0xc] sm:$0xff] %vm289, %v609
  %614 = vst.msk [vmem:[#allocation2 + $0x1c] sm:$0xff] %vm289, %v610
  %615 = vst.msk [vmem:[#allocation2 + $0x24] sm:$0xff] %vm289, %v611
  %v616 = vld [vmem:[#allocation2 + $0x2] sm:$0xff]
  %v617 = vld [vmem:[#allocation2 + $0xa] sm:$0xff]
  %v618 = vld [vmem:[#allocation2 + $0x1a] sm:$0xff]
  %v619 = vld [vmem:[#allocation2 + $0x22] sm:$0xff]
  %v620 = vld [vmem:[%s7] sm:$0xff]
  %v621 = vld [vmem:[%s7 + $0x8] sm:$0xff]
  %v622 = vld [vmem:[%s7 + $0x10] sm:$0xff]
  %v623 = vld [vmem:[%s7 + $0x18] sm:$0xff]
  %v625 = vsel %vm289, %v608, 0
  %v628 = vsel %vm289, %v609, 0
  %v631 = vsel %vm289, %v610, 0
  %v634 = vsel %vm289, %v611, 0
  %636 = vmatprep.subr.mxu0 0.0
  %637 = vmatpush1.msra.mxu0 0.0
  %638 = vmatprep.subr.mxu0 0.0
  %639 = vmatpush1.msra.mxu0 0.0
  %640 = vmatprep.subr.mxu0 0.0
  %641 = vmatpush1.msra.mxu0 0.0
  %642 = vmatprep.subr.mxu0 0.0
  %643 = vmatpush1.msra.mxu0 0.0
  %644 = vmatprep.subr.mxu0 0.0
  %645 = vmatpush1.msra.mxu0 0.0
  %646 = vmatprep.subr.mxu0 0.0
  %647 = vmatpush1.msra.mxu0 0.0
  %648 = vmatprep.subr.mxu0 0.0
  %649 = vmatpush1.msra.mxu0 0.0
  %650 = vmatprep.subr.mxu0 0.0
  %651 = vmatpush1.msra.mxu0 0.0
  %652 = vmatprep.subr.mxu0 0.0
  %653 = vmatpush1.msra.mxu0 0.0
  %654 = vmatprep.subr.mxu0 0.0
  %655 = vmatpush1.msra.mxu0 0.0
  %656 = vmatprep.subr.mxu0 0.0
  %657 = vmatpush1.msra.mxu0 0.0
  %658 = vmatprep.subr.mxu0 0.0
  %659 = vmatpush1.msra.mxu0 0.0
  %660 = vmatprep.subr.mxu0 0.0
  %661 = vmatpush1.msra.mxu0 0.0
  %662 = vmatprep.subr.mxu0 0.0
  %663 = vmatpush1.msra.mxu0 0.0
  %664 = vmatprep.subr.mxu0 0.0
  %665 = vmatpush1.msra.mxu0 %v623
  %666 = vmatprep.subr.mxu0 0.0
  %667 = vmatpush1.msra.mxu0 %v622
  %668 = vmatprep.subr.mxu0 0.0
  %669 = vmatpush2.msra.mxu0 0.0
  %670 = vmatprep.subr.mxu0 0.0
  %671 = vmatpush2.msra.mxu0 0.0
  %672 = vmatprep.subr.mxu0 0.0
  %673 = vmatpush2.msra.mxu0 0.0
  %674 = vmatprep.subr.mxu0 0.0
  %675 = vmatpush2.msra.mxu0 0.0
  %676 = vmatprep.subr.mxu0 0.0
  %677 = vmatpush2.msra.mxu0 0.0
  %678 = vmatprep.subr.mxu0 0.0
  %679 = vmatpush2.msra.mxu0 0.0
  %680 = vmatprep.subr.mxu0 0.0
  %681 = vmatpush2.msra.mxu0 0.0
  %682 = vmatprep.subr.mxu0 0.0
  %683 = vmatpush2.msra.mxu0 0.0
  %684 = vmatprep.subr.mxu0 0.0
  %685 = vmatpush2.msra.mxu0 0.0
  %686 = vmatprep.subr.mxu0 0.0
  %687 = vmatpush2.msra.mxu0 0.0
  %688 = vmatprep.subr.mxu0 0.0
  %689 = vmatpush2.msra.mxu0 0.0
  %690 = vmatprep.subr.mxu0 0.0
  %691 = vmatpush2.msra.mxu0 0.0
  %692 = vmatprep.subr.mxu0 0.0
  %693 = vmatpush2.msra.mxu0 0.0
  %694 = vmatprep.subr.mxu0 0.0
  %695 = vmatpush2.msra.mxu0 0.0
  %696 = vmatprep.subr.mxu0 0.0
  %697 = vmatpush2.msra.mxu0 0.0
  %698 = vmatprep.subr.mxu0 0.0
  %699 = vmatpush2.msra.mxu0 0.0
  %700 = vmatprep.mubr.f32.mxu0 0.0
  %701 = vmatmul.mubr.f32.gmra.mxu0 %v625
  %v702 = vpop.f32.mrf.mxu0
  %v703 = vadd.f32 0.0, %v702
  %v704 = vpop.f32.mrf.mxu0
  %705 = vmatprep.mubr.f32.mxu0 0.0
  %706 = vmatmul.mubr.f32.gmra.mxu0 %v628
  %v707 = vpop.f32.mrf.mxu0
  %v708 = vadd.f32 0.0, %v707
  %v709 = vpop.f32.mrf.mxu0
  %710 = vmatprep.mubr.f32.mxu0 0.0
  %711 = vmatmul.mubr.f32.gmra.mxu0 %v631
  %v712 = vpop.f32.mrf.mxu0
  %v713 = vadd.f32 0.0, %v712
  %v714 = vpop.f32.mrf.mxu0
  %715 = vmatprep.mubr.f32.mxu0 0.0
  %716 = vmatmul.mubr.f32.gmra.mxu0 %v634
  %v717 = vpop.f32.mrf.mxu0
  %v718 = vadd.f32 0.0, %v717
  %v719 = vpop.f32.mrf.mxu0
  %720 = vdwg.mxu0
  %v722 = vsel %vm289, %v616, 0
  %v725 = vsel %vm289, %v617, 0
  %v728 = vsel %vm289, %v618, 0
  %v731 = vsel %vm289, %v619, 0
  %733 = vmatprep.subr.mxu0 0.0
  %734 = vmatpush1.msra.mxu0 0.0
  %735 = vmatprep.subr.mxu0 0.0
  %736 = vmatpush1.msra.mxu0 0.0
  %737 = vmatprep.subr.mxu0 0.0
  %738 = vmatpush1.msra.mxu0 0.0
  %739 = vmatprep.subr.mxu0 0.0
  %740 = vmatpush1.msra.mxu0 0.0
  %741 = vmatprep.subr.mxu0 0.0
  %742 = vmatpush1.msra.mxu0 0.0
  %743 = vmatprep.subr.mxu0 0.0
  %744 = vmatpush1.msra.mxu0 0.0
  %745 = vmatprep.subr.mxu0 0.0
  %746 = vmatpush1.msra.mxu0 0.0
  %747 = vmatprep.subr.mxu0 0.0
  %748 = vmatpush1.msra.mxu0 0.0
  %749 = vmatprep.subr.mxu0 0.0
  %750 = vmatpush1.msra.mxu0 0.0
  %751 = vmatprep.subr.mxu0 0.0
  %752 = vmatpush1.msra.mxu0 0.0
  %753 = vmatprep.subr.mxu0 0.0
  %754 = vmatpush1.msra.mxu0 0.0
  %755 = vmatprep.subr.mxu0 0.0
  %756 = vmatpush1.msra.mxu0 0.0
  %757 = vmatprep.subr.mxu0 0.0
  %758 = vmatpush1.msra.mxu0 0.0
  %759 = vmatprep.subr.mxu0 0.0
  %760 = vmatpush1.msra.mxu0 0.0
  %761 = vmatprep.subr.mxu0 0.0
  %762 = vmatpush1.msra.mxu0 %v621
  %763 = vmatprep.subr.mxu0 0.0
  %764 = vmatpush1.msra.mxu0 %v620
  %765 = vmatprep.subr.mxu0 0.0
  %766 = vmatpush2.msra.mxu0 0.0
  %767 = vmatprep.subr.mxu0 0.0
  %768 = vmatpush2.msra.mxu0 0.0
  %769 = vmatprep.subr.mxu0 0.0
  %770 = vmatpush2.msra.mxu0 0.0
  %771 = vmatprep.subr.mxu0 0.0
  %772 = vmatpush2.msra.mxu0 0.0
  %773 = vmatprep.subr.mxu0 0.0
  %774 = vmatpush2.msra.mxu0 0.0
  %775 = vmatprep.subr.mxu0 0.0
  %776 = vmatpush2.msra.mxu0 0.0
  %777 = vmatprep.subr.mxu0 0.0
  %778 = vmatpush2.msra.mxu0 0.0
  %779 = vmatprep.subr.mxu0 0.0
  %780 = vmatpush2.msra.mxu0 0.0
  %781 = vmatprep.subr.mxu0 0.0
  %782 = vmatpush2.msra.mxu0 0.0
  %783 = vmatprep.subr.mxu0 0.0
  %784 = vmatpush2.msra.mxu0 0.0
  %785 = vmatprep.subr.mxu0 0.0
  %786 = vmatpush2.msra.mxu0 0.0
  %787 = vmatprep.subr.mxu0 0.0
  %788 = vmatpush2.msra.mxu0 0.0
  %789 = vmatprep.subr.mxu0 0.0
  %790 = vmatpush2.msra.mxu0 0.0
  %791 = vmatprep.subr.mxu0 0.0
  %792 = vmatpush2.msra.mxu0 0.0
  %793 = vmatprep.subr.mxu0 0.0
  %794 = vmatpush2.msra.mxu0 0.0
  %795 = vmatprep.subr.mxu0 0.0
  %796 = vmatpush2.msra.mxu0 0.0
  %797 = vmatprep.mubr.f32.mxu0 0.0
  %798 = vmatmul.mubr.f32.gmra.mxu0 %v722
  %v799 = vpop.f32.mrf.mxu0
  %v800 = vadd.f32 %v703, %v799
  %v801 = vpop.f32.mrf.mxu0
  %802 = vmatprep.mubr.f32.mxu0 0.0
  %803 = vmatmul.mubr.f32.gmra.mxu0 %v725
  %v804 = vpop.f32.mrf.mxu0
  %v805 = vadd.f32 %v708, %v804
  %v806 = vpop.f32.mrf.mxu0
  %807 = vmatprep.mubr.f32.mxu0 0.0
  %808 = vmatmul.mubr.f32.gmra.mxu0 %v728
  %v809 = vpop.f32.mrf.mxu0
  %v810 = vadd.f32 %v713, %v809
  %v811 = vpop.f32.mrf.mxu0
  %812 = vmatprep.mubr.f32.mxu0 0.0
  %813 = vmatmul.mubr.f32.gmra.mxu0 %v731
  %v814 = vpop.f32.mrf.mxu0
  %v815 = vadd.f32 %v718, %v814
  %v816 = vpop.f32.mrf.mxu0
  %817 = vdwg.mxu0
  %v818 = vld [vmem:[%s8] sm:$0x1]
  %v820 = vlaneseq
  %v821 = vshrl.u32 %v820, 7
  %v822 = vsub.s32 0, %v821
  %v823 = vrot.slane %v818, %v822
  %v825 = vadd.f32 %v800, %v823
  %v826 = vadd.f32 %v805, %v823
  %v827 = vadd.f32 %v810, %v823
  %v828 = vadd.f32 %v815, %v823
  %v829 = vmax.f32 %v825, 0.0
  %v830 = vmax.f32 %v826, 0.0
  %v831 = vmax.f32 %v827, 0.0
  %v832 = vmax.f32 %v828, 0.0
  %833 = vst.msk [vmem:[#allocation2 + $0x4] sm:$0xff] %vm289, %v829
  %834 = vst.msk [vmem:[#allocation2 + $0xc] sm:$0xff] %vm289, %v830
  %835 = vst.msk [vmem:[#allocation2 + $0x1c] sm:$0xff] %vm289, %v831
  %836 = vst.msk [vmem:[#allocation2 + $0x24] sm:$0xff] %vm289, %v832
  %v837 = vld [vmem:[#allocation2 + $0x2] sm:$0xff]
  %v838 = vld [vmem:[#allocation2 + $0xa] sm:$0xff]
  %v839 = vld [vmem:[#allocation2 + $0x1a] sm:$0xff]
  %v840 = vld [vmem:[#allocation2 + $0x22] sm:$0xff]
  %v841 = vld [vmem:[%s9] sm:$0xff]
  %v842 = vld [vmem:[%s9 + $0x8] sm:$0xff]
  %v843 = vld [vmem:[%s9 + $0x10] sm:$0xff]
  %v844 = vld [vmem:[%s9 + $0x18] sm:$0xff]
  %v846 = vsel %vm289, %v829, 0
  %v849 = vsel %vm289, %v830, 0
  %v852 = vsel %vm289, %v831, 0
  %v855 = vsel %vm289, %v832, 0
  %857 = vmatprep.subr.mxu0 0.0
  %858 = vmatpush1.msra.mxu0 0.0
  %859 = vmatprep.subr.mxu0 0.0
  %860 = vmatpush1.msra.mxu0 0.0
  %861 = vmatprep.subr.mxu0 0.0
  %862 = vmatpush1.msra.mxu0 0.0
  %863 = vmatprep.subr.mxu0 0.0
  %864 = vmatpush1.msra.mxu0 0.0
  %865 = vmatprep.subr.mxu0 0.0
  %866 = vmatpush1.msra.mxu0 0.0
  %867 = vmatprep.subr.mxu0 0.0
  %868 = vmatpush1.msra.mxu0 0.0
  %869 = vmatprep.subr.mxu0 0.0
  %870 = vmatpush1.msra.mxu0 0.0
  %871 = vmatprep.subr.mxu0 0.0
  %872 = vmatpush1.msra.mxu0 0.0
  %873 = vmatprep.subr.mxu0 0.0
  %874 = vmatpush1.msra.mxu0 0.0
  %875 = vmatprep.subr.mxu0 0.0
  %876 = vmatpush1.msra.mxu0 0.0
  %877 = vmatprep.subr.mxu0 0.0
  %878 = vmatpush1.msra.mxu0 0.0
  %879 = vmatprep.subr.mxu0 0.0
  %880 = vmatpush1.msra.mxu0 0.0
  %881 = vmatprep.subr.mxu0 0.0
  %882 = vmatpush1.msra.mxu0 0.0
  %883 = vmatprep.subr.mxu0 0.0
  %884 = vmatpush1.msra.mxu0 0.0
  %885 = vmatprep.subr.mxu0 0.0
  %886 = vmatpush1.msra.mxu0 %v844
  %887 = vmatprep.subr.mxu0 0.0
  %888 = vmatpush1.msra.mxu0 %v843
  %889 = vmatprep.subr.mxu0 0.0
  %890 = vmatpush2.msra.mxu0 0.0
  %891 = vmatprep.subr.mxu0 0.0
  %892 = vmatpush2.msra.mxu0 0.0
  %893 = vmatprep.subr.mxu0 0.0
  %894 = vmatpush2.msra.mxu0 0.0
  %895 = vmatprep.subr.mxu0 0.0
  %896 = vmatpush2.msra.mxu0 0.0
  %897 = vmatprep.subr.mxu0 0.0
  %898 = vmatpush2.msra.mxu0 0.0
  %899 = vmatprep.subr.mxu0 0.0
  %900 = vmatpush2.msra.mxu0 0.0
  %901 = vmatprep.subr.mxu0 0.0
  %902 = vmatpush2.msra.mxu0 0.0
  %903 = vmatprep.subr.mxu0 0.0
  %904 = vmatpush2.msra.mxu0 0.0
  %905 = vmatprep.subr.mxu0 0.0
  %906 = vmatpush2.msra.mxu0 0.0
  %907 = vmatprep.subr.mxu0 0.0
  %908 = vmatpush2.msra.mxu0 0.0
  %909 = vmatprep.subr.mxu0 0.0
  %910 = vmatpush2.msra.mxu0 0.0
  %911 = vmatprep.subr.mxu0 0.0
  %912 = vmatpush2.msra.mxu0 0.0
  %913 = vmatprep.subr.mxu0 0.0
  %914 = vmatpush2.msra.mxu0 0.0
  %915 = vmatprep.subr.mxu0 0.0
  %916 = vmatpush2.msra.mxu0 0.0
  %917 = vmatprep.subr.mxu0 0.0
  %918 = vmatpush2.msra.mxu0 0.0
  %919 = vmatprep.subr.mxu0 0.0
  %920 = vmatpush2.msra.mxu0 0.0
  %921 = vmatprep.mubr.f32.mxu0 0.0
  %922 = vmatmul.mubr.f32.gmra.mxu0 %v846
  %v923 = vpop.f32.mrf.mxu0
  %v924 = vadd.f32 0.0, %v923
  %v925 = vpop.f32.mrf.mxu0
  %926 = vmatprep.mubr.f32.mxu0 0.0
  %927 = vmatmul.mubr.f32.gmra.mxu0 %v849
  %v928 = vpop.f32.mrf.mxu0
  %v929 = vadd.f32 0.0, %v928
  %v930 = vpop.f32.mrf.mxu0
  %931 = vmatprep.mubr.f32.mxu0 0.0
  %932 = vmatmul.mubr.f32.gmra.mxu0 %v852
  %v933 = vpop.f32.mrf.mxu0
  %v934 = vadd.f32 0.0, %v933
  %v935 = vpop.f32.mrf.mxu0
  %936 = vmatprep.mubr.f32.mxu0 0.0
  %937 = vmatmul.mubr.f32.gmra.mxu0 %v855
  %v938 = vpop.f32.mrf.mxu0
  %v939 = vadd.f32 0.0, %v938
  %v940 = vpop.f32.mrf.mxu0
  %941 = vdwg.mxu0
  %v943 = vsel %vm289, %v837, 0
  %v946 = vsel %vm289, %v838, 0
  %v949 = vsel %vm289, %v839, 0
  %v952 = vsel %vm289, %v840, 0
  %954 = vmatprep.subr.mxu0 0.0
  %955 = vmatpush1.msra.mxu0 0.0
  %956 = vmatprep.subr.mxu0 0.0
  %957 = vmatpush1.msra.mxu0 0.0
  %958 = vmatprep.subr.mxu0 0.0
  %959 = vmatpush1.msra.mxu0 0.0
  %960 = vmatprep.subr.mxu0 0.0
  %961 = vmatpush1.msra.mxu0 0.0
  %962 = vmatprep.subr.mxu0 0.0
  %963 = vmatpush1.msra.mxu0 0.0
  %964 = vmatprep.subr.mxu0 0.0
  %965 = vmatpush1.msra.mxu0 0.0
  %966 = vmatprep.subr.mxu0 0.0
  %967 = vmatpush1.msra.mxu0 0.0
  %968 = vmatprep.subr.mxu0 0.0
  %969 = vmatpush1.msra.mxu0 0.0
  %970 = vmatprep.subr.mxu0 0.0
  %971 = vmatpush1.msra.mxu0 0.0
  %972 = vmatprep.subr.mxu0 0.0
  %973 = vmatpush1.msra.mxu0 0.0
  %974 = vmatprep.subr.mxu0 0.0
  %975 = vmatpush1.msra.mxu0 0.0
  %976 = vmatprep.subr.mxu0 0.0
  %977 = vmatpush1.msra.mxu0 0.0
  %978 = vmatprep.subr.mxu0 0.0
  %979 = vmatpush1.msra.mxu0 0.0
  %980 = vmatprep.subr.mxu0 0.0
  %981 = vmatpush1.msra.mxu0 0.0
  %982 = vmatprep.subr.mxu0 0.0
  %983 = vmatpush1.msra.mxu0 %v842
  %984 = vmatprep.subr.mxu0 0.0
  %985 = vmatpush1.msra.mxu0 %v841
  %986 = vmatprep.subr.mxu0 0.0
  %987 = vmatpush2.msra.mxu0 0.0
  %988 = vmatprep.subr.mxu0 0.0
  %989 = vmatpush2.msra.mxu0 0.0
  %990 = vmatprep.subr.mxu0 0.0
  %991 = vmatpush2.msra.mxu0 0.0
  %992 = vmatprep.subr.mxu0 0.0
  %993 = vmatpush2.msra.mxu0 0.0
  %994 = vmatprep.subr.mxu0 0.0
  %995 = vmatpush2.msra.mxu0 0.0
  %996 = vmatprep.subr.mxu0 0.0
  %997 = vmatpush2.msra.mxu0 0.0
  %998 = vmatprep.subr.mxu0 0.0
  %999 = vmatpush2.msra.mxu0 0.0
  %1000 = vmatprep.subr.mxu0 0.0
  %1001 = vmatpush2.msra.mxu0 0.0
  %1002 = vmatprep.subr.mxu0 0.0
  %1003 = vmatpush2.msra.mxu0 0.0
  %1004 = vmatprep.subr.mxu0 0.0
  %1005 = vmatpush2.msra.mxu0 0.0
  %1006 = vmatprep.subr.mxu0 0.0
  %1007 = vmatpush2.msra.mxu0 0.0
  %1008 = vmatprep.subr.mxu0 0.0
  %1009 = vmatpush2.msra.mxu0 0.0
  %1010 = vmatprep.subr.mxu0 0.0
  %1011 = vmatpush2.msra.mxu0 0.0
  %1012 = vmatprep.subr.mxu0 0.0
  %1013 = vmatpush2.msra.mxu0 0.0
  %1014 = vmatprep.subr.mxu0 0.0
  %1015 = vmatpush2.msra.mxu0 0.0
  %1016 = vmatprep.subr.mxu0 0.0
  %1017 = vmatpush2.msra.mxu0 0.0
  %1018 = vmatprep.mubr.f32.mxu0 0.0
  %1019 = vmatmul.mubr.f32.gmra.mxu0 %v943
  %v1020 = vpop.f32.mrf.mxu0
  %v1021 = vadd.f32 %v924, %v1020
  %v1022 = vpop.f32.mrf.mxu0
  %1023 = vmatprep.mubr.f32.mxu0 0.0
  %1024 = vmatmul.mubr.f32.gmra.mxu0 %v946
  %v1025 = vpop.f32.mrf.mxu0
  %v1026 = vadd.f32 %v929, %v1025
  %v1027 = vpop.f32.mrf.mxu0
  %1028 = vmatprep.mubr.f32.mxu0 0.0
  %1029 = vmatmul.mubr.f32.gmra.mxu0 %v949
  %v1030 = vpop.f32.mrf.mxu0
  %v1031 = vadd.f32 %v934, %v1030
  %v1032 = vpop.f32.mrf.mxu0
  %1033 = vmatprep.mubr.f32.mxu0 0.0
  %1034 = vmatmul.mubr.f32.gmra.mxu0 %v952
  %v1035 = vpop.f32.mrf.mxu0
  %v1036 = vadd.f32 %v939, %v1035
  %v1037 = vpop.f32.mrf.mxu0
  %1038 = vdwg.mxu0
  %v1039 = vld [vmem:[%s10] sm:$0x1]
  %v1041 = vlaneseq
  %v1042 = vshrl.u32 %v1041, 7
  %v1043 = vsub.s32 0, %v1042
  %v1044 = vrot.slane %v1039, %v1043
  %v1046 = vadd.f32 %v1021, %v1044
  %v1047 = vadd.f32 %v1026, %v1044
  %v1048 = vadd.f32 %v1031, %v1044
  %v1049 = vadd.f32 %v1036, %v1044
  %v1050 = vmax.f32 %v1046, 0.0
  %v1051 = vmax.f32 %v1047, 0.0
  %v1052 = vmax.f32 %v1048, 0.0
  %v1053 = vmax.f32 %v1049, 0.0
  %v1054 = vadd.f32 %v1050, %v608
  %v1055 = vadd.f32 %v1051, %v609
  %v1056 = vadd.f32 %v1052, %v610
  %v1057 = vadd.f32 %v1053, %v611
  %v1058 = vmax.f32 %v1054, 0.0
  %v1059 = vmax.f32 %v1055, 0.0
  %v1060 = vmax.f32 %v1056, 0.0
  %v1061 = vmax.f32 %v1057, 0.0
  %1062 = vst.msk [vmem:[#allocation2 + $0x4] sm:$0xff] %vm289, %v1058
  %1063 = vst.msk [vmem:[#allocation2 + $0xc] sm:$0xff] %vm289, %v1059
  %1064 = vst.msk [vmem:[#allocation2 + $0x1c] sm:$0xff] %vm289, %v1060
  %1065 = vst.msk [vmem:[#allocation2 + $0x24] sm:$0xff] %vm289, %v1061
  %v1066 = vld [vmem:[#allocation2] sm:$0xff]
  %v1067 = vld [vmem:[#allocation2 + $0x8] sm:$0xff]
  %v1068 = vld [vmem:[#allocation2 + $0x18] sm:$0xff]
  %v1069 = vld [vmem:[#allocation2 + $0x20] sm:$0xff]
  %v1070 = vld [vmem:[%s11] sm:$0xff]
  %v1071 = vld [vmem:[%s11 + $0x8] sm:$0xff]
  %v1072 = vld [vmem:[%s11 + $0x10] sm:$0xff]
  %v1073 = vld [vmem:[%s11 + $0x18] sm:$0xff]
  %v1075 = vsel %vm289, %v1058, 0
  %v1078 = vsel %vm289, %v1059, 0
  %v1081 = vsel %vm289, %v1060, 0
  %v1084 = vsel %vm289, %v1061, 0
  %1086 = vmatprep.subr.mxu0 0.0
  %1087 = vmatpush1.msra.mxu0 0.0
  %1088 = vmatprep.subr.mxu0 0.0
  %1089 = vmatpush1.msra.mxu0 0.0
  %1090 = vmatprep.subr.mxu0 0.0
  %1091 = vmatpush1.msra.mxu0 0.0
  %1092 = vmatprep.subr.mxu0 0.0
  %1093 = vmatpush1.msra.mxu0 0.0
  %1094 = vmatprep.subr.mxu0 0.0
  %1095 = vmatpush1.msra.mxu0 0.0
  %1096 = vmatprep.subr.mxu0 0.0
  %1097 = vmatpush1.msra.mxu0 0.0
  %1098 = vmatprep.subr.mxu0 0.0
  %1099 = vmatpush1.msra.mxu0 0.0
  %1100 = vmatprep.subr.mxu0 0.0
  %1101 = vmatpush1.msra.mxu0 0.0
  %1102 = vmatprep.subr.mxu0 0.0
  %1103 = vmatpush1.msra.mxu0 0.0
  %1104 = vmatprep.subr.mxu0 0.0
  %1105 = vmatpush1.msra.mxu0 0.0
  %1106 = vmatprep.subr.mxu0 0.0
  %1107 = vmatpush1.msra.mxu0 0.0
  %1108 = vmatprep.subr.mxu0 0.0
  %1109 = vmatpush1.msra.mxu0 0.0
  %1110 = vmatprep.subr.mxu0 0.0
  %1111 = vmatpush1.msra.mxu0 0.0
  %1112 = vmatprep.subr.mxu0 0.0
  %1113 = vmatpush1.msra.mxu0 0.0
  %1114 = vmatprep.subr.mxu0 0.0
  %1115 = vmatpush1.msra.mxu0 %v1073
  %1116 = vmatprep.subr.mxu0 0.0
  %1117 = vmatpush1.msra.mxu0 %v1072
  %1118 = vmatprep.subr.mxu0 0.0
  %1119 = vmatpush2.msra.mxu0 0.0
  %1120 = vmatprep.subr.mxu0 0.0
  %1121 = vmatpush2.msra.mxu0 0.0
  %1122 = vmatprep.subr.mxu0 0.0
  %1123 = vmatpush2.msra.mxu0 0.0
  %1124 = vmatprep.subr.mxu0 0.0
  %1125 = vmatpush2.msra.mxu0 0.0
  %1126 = vmatprep.subr.mxu0 0.0
  %1127 = vmatpush2.msra.mxu0 0.0
  %1128 = vmatprep.subr.mxu0 0.0
  %1129 = vmatpush2.msra.mxu0 0.0
  %1130 = vmatprep.subr.mxu0 0.0
  %1131 = vmatpush2.msra.mxu0 0.0
  %1132 = vmatprep.subr.mxu0 0.0
  %1133 = vmatpush2.msra.mxu0 0.0
  %1134 = vmatprep.subr.mxu0 0.0
  %1135 = vmatpush2.msra.mxu0 0.0
  %1136 = vmatprep.subr.mxu0 0.0
  %1137 = vmatpush2.msra.mxu0 0.0
  %1138 = vmatprep.subr.mxu0 0.0
  %1139 = vmatpush2.msra.mxu0 0.0
  %1140 = vmatprep.subr.mxu0 0.0
  %1141 = vmatpush2.msra.mxu0 0.0
  %1142 = vmatprep.subr.mxu0 0.0
  %1143 = vmatpush2.msra.mxu0 0.0
  %1144 = vmatprep.subr.mxu0 0.0
  %1145 = vmatpush2.msra.mxu0 0.0
  %1146 = vmatprep.subr.mxu0 0.0
  %1147 = vmatpush2.msra.mxu0 0.0
  %1148 = vmatprep.subr.mxu0 0.0
  %1149 = vmatpush2.msra.mxu0 0.0
  %1150 = vmatprep.mubr.f32.mxu0 0.0
  %1151 = vmatmul.mubr.f32.gmra.mxu0 %v1075
  %v1152 = vpop.f32.mrf.mxu0
  %v1153 = vadd.f32 0.0, %v1152
  %v1154 = vpop.f32.mrf.mxu0
  %1155 = vmatprep.mubr.f32.mxu0 0.0
  %1156 = vmatmul.mubr.f32.gmra.mxu0 %v1078
  %v1157 = vpop.f32.mrf.mxu0
  %v1158 = vadd.f32 0.0, %v1157
  %v1159 = vpop.f32.mrf.mxu0
  %1160 = vmatprep.mubr.f32.mxu0 0.0
  %1161 = vmatmul.mubr.f32.gmra.mxu0 %v1081
  %v1162 = vpop.f32.mrf.mxu0
  %v1163 = vadd.f32 0.0, %v1162
  %v1164 = vpop.f32.mrf.mxu0
  %1165 = vmatprep.mubr.f32.mxu0 0.0
  %1166 = vmatmul.mubr.f32.gmra.mxu0 %v1084
  %v1167 = vpop.f32.mrf.mxu0
  %v1168 = vadd.f32 0.0, %v1167
  %v1169 = vpop.f32.mrf.mxu0
  %1170 = vdwg.mxu0
  %v1172 = vsel %vm289, %v1066, 0
  %v1175 = vsel %vm289, %v1067, 0
  %v1178 = vsel %vm289, %v1068, 0
  %v1181 = vsel %vm289, %v1069, 0
  %1183 = vmatprep.subr.mxu0 0.0
  %1184 = vmatpush1.msra.mxu0 0.0
  %1185 = vmatprep.subr.mxu0 0.0
  %1186 = vmatpush1.msra.mxu0 0.0
  %1187 = vmatprep.subr.mxu0 0.0
  %1188 = vmatpush1.msra.mxu0 0.0
  %1189 = vmatprep.subr.mxu0 0.0
  %1190 = vmatpush1.msra.mxu0 0.0
  %1191 = vmatprep.subr.mxu0 0.0
  %1192 = vmatpush1.msra.mxu0 0.0
  %1193 = vmatprep.subr.mxu0 0.0
  %1194 = vmatpush1.msra.mxu0 0.0
  %1195 = vmatprep.subr.mxu0 0.0
  %1196 = vmatpush1.msra.mxu0 0.0
  %1197 = vmatprep.subr.mxu0 0.0
  %1198 = vmatpush1.msra.mxu0 0.0
  %1199 = vmatprep.subr.mxu0 0.0
  %1200 = vmatpush1.msra.mxu0 0.0
  %1201 = vmatprep.subr.mxu0 0.0
  %1202 = vmatpush1.msra.mxu0 0.0
  %1203 = vmatprep.subr.mxu0 0.0
  %1204 = vmatpush1.msra.mxu0 0.0
  %1205 = vmatprep.subr.mxu0 0.0
  %1206 = vmatpush1.msra.mxu0 0.0
  %1207 = vmatprep.subr.mxu0 0.0
  %1208 = vmatpush1.msra.mxu0 0.0
  %1209 = vmatprep.subr.mxu0 0.0
  %1210 = vmatpush1.msra.mxu0 0.0
  %1211 = vmatprep.subr.mxu0 0.0
  %1212 = vmatpush1.msra.mxu0 %v1071
  %1213 = vmatprep.subr.mxu0 0.0
  %1214 = vmatpush1.msra.mxu0 %v1070
  %1215 = vmatprep.subr.mxu0 0.0
  %1216 = vmatpush2.msra.mxu0 0.0
  %1217 = vmatprep.subr.mxu0 0.0
  %1218 = vmatpush2.msra.mxu0 0.0
  %1219 = vmatprep.subr.mxu0 0.0
  %1220 = vmatpush2.msra.mxu0 0.0
  %1221 = vmatprep.subr.mxu0 0.0
  %1222 = vmatpush2.msra.mxu0 0.0
  %1223 = vmatprep.subr.mxu0 0.0
  %1224 = vmatpush2.msra.mxu0 0.0
  %1225 = vmatprep.subr.mxu0 0.0
  %1226 = vmatpush2.msra.mxu0 0.0
  %1227 = vmatprep.subr.mxu0 0.0
  %1228 = vmatpush2.msra.mxu0 0.0
  %1229 = vmatprep.subr.mxu0 0.0
  %1230 = vmatpush2.msra.mxu0 0.0
  %1231 = vmatprep.subr.mxu0 0.0
  %1232 = vmatpush2.msra.mxu0 0.0
  %1233 = vmatprep.subr.mxu0 0.0
  %1234 = vmatpush2.msra.mxu0 0.0
  %1235 = vmatprep.subr.mxu0 0.0
  %1236 = vmatpush2.msra.mxu0 0.0
  %1237 = vmatprep.subr.mxu0 0.0
  %1238 = vmatpush2.msra.mxu0 0.0
  %1239 = vmatprep.subr.mxu0 0.0
  %1240 = vmatpush2.msra.mxu0 0.0
  %1241 = vmatprep.subr.mxu0 0.0
  %1242 = vmatpush2.msra.mxu0 0.0
  %1243 = vmatprep.subr.mxu0 0.0
  %1244 = vmatpush2.msra.mxu0 0.0
  %1245 = vmatprep.subr.mxu0 0.0
  %1246 = vmatpush2.msra.mxu0 0.0
  %1247 = vmatprep.mubr.f32.mxu0 0.0
  %1248 = vmatmul.mubr.f32.gmra.mxu0 %v1172
  %v1249 = vpop.f32.mrf.mxu0
  %v1250 = vadd.f32 %v1153, %v1249
  %v1251 = vpop.f32.mrf.mxu0
  %1252 = vmatprep.mubr.f32.mxu0 0.0
  %1253 = vmatmul.mubr.f32.gmra.mxu0 %v1175
  %v1254 = vpop.f32.mrf.mxu0
  %v1255 = vadd.f32 %v1158, %v1254
  %v1256 = vpop.f32.mrf.mxu0
  %1257 = vmatprep.mubr.f32.mxu0 0.0
  %1258 = vmatmul.mubr.f32.gmra.mxu0 %v1178
  %v1259 = vpop.f32.mrf.mxu0
  %v1260 = vadd.f32 %v1163, %v1259
  %v1261 = vpop.f32.mrf.mxu0
  %1262 = vmatprep.mubr.f32.mxu0 0.0
  %1263 = vmatmul.mubr.f32.gmra.mxu0 %v1181
  %v1264 = vpop.f32.mrf.mxu0
  %v1265 = vadd.f32 %v1168, %v1264
  %v1266 = vpop.f32.mrf.mxu0
  %1267 = vdwg.mxu0
  %v1268 = vld [vmem:[%s12] sm:$0x1]
  %v1270 = vlaneseq
  %v1271 = vshrl.u32 %v1270, 7
  %v1272 = vsub.s32 0, %v1271
  %v1273 = vrot.slane %v1268, %v1272
  %v1275 = vadd.f32 %v1250, %v1273
  %v1276 = vadd.f32 %v1255, %v1273
  %v1277 = vadd.f32 %v1260, %v1273
  %v1278 = vadd.f32 %v1265, %v1273
  %v1279 = vmax.f32 %v1275, 0.0
  %v1280 = vmax.f32 %v1276, 0.0
  %v1281 = vmax.f32 %v1277, 0.0
  %v1282 = vmax.f32 %v1278, 0.0
  %vm1283 = vcmask 261120
  %1284 = vst.msk [vmem:[#allocation2 + $0x4] sm:$0xff] %vm1283, %v1279
  %1285 = vst.msk [vmem:[#allocation2 + $0xc] sm:$0xff] %vm1283, %v1280
  %1286 = vst.msk [vmem:[#allocation2 + $0x1c] sm:$0xff] %vm1283, %v1281
  %1287 = vst.msk [vmem:[#allocation2 + $0x24] sm:$0xff] %vm1283, %v1282
  %v1288 = vld [vmem:[#allocation2] sm:$0xff]
  %v1289 = vld [vmem:[#allocation2 + $0x8] sm:$0xff]
  %v1290 = vld [vmem:[#allocation2 + $0x18] sm:$0xff]
  %v1291 = vld [vmem:[#allocation2 + $0x20] sm:$0xff]
  %v1292 = vld [vmem:[%s13] sm:$0xff]
  %v1293 = vld [vmem:[%s13 + $0x8] sm:$0xff]
  %v1294 = vld [vmem:[%s13 + $0x10] sm:$0xff]
  %v1295 = vld [vmem:[%s13 + $0x18] sm:$0xff]
  %v1296 = vld [vmem:[%s13 + $0x20] sm:$0xff]
  %v1297 = vld [vmem:[%s13 + $0x28] sm:$0xff]
  %v1298 = vld [vmem:[%s13 + $0x30] sm:$0xff]
  %v1299 = vld [vmem:[%s13 + $0x38] sm:$0xff]
  %v1301 = vsel %vm1283, %v1279, 0
  %v1304 = vsel %vm1283, %v1280, 0
  %v1307 = vsel %vm1283, %v1281, 0
  %v1310 = vsel %vm1283, %v1282, 0
  %1312 = vmatprep.subr.mxu0 0.0
  %1313 = vmatpush1.msra.mxu0 0.0
  %1314 = vmatprep.subr.mxu0 0.0
  %1315 = vmatpush1.msra.mxu0 0.0
  %1316 = vmatprep.subr.mxu0 0.0
  %1317 = vmatpush1.msra.mxu0 0.0
  %1318 = vmatprep.subr.mxu0 0.0
  %1319 = vmatpush1.msra.mxu0 0.0
  %1320 = vmatprep.subr.mxu0 0.0
  %1321 = vmatpush1.msra.mxu0 0.0
  %1322 = vmatprep.subr.mxu0 0.0
  %1323 = vmatpush1.msra.mxu0 0.0
  %1324 = vmatprep.subr.mxu0 0.0
  %1325 = vmatpush1.msra.mxu0 0.0
  %1326 = vmatprep.subr.mxu0 0.0
  %1327 = vmatpush1.msra.mxu0 0.0
  %1328 = vmatprep.subr.mxu0 0.0
  %1329 = vmatpush1.msra.mxu0 0.0
  %1330 = vmatprep.subr.mxu0 0.0
  %1331 = vmatpush1.msra.mxu0 0.0
  %1332 = vmatprep.subr.mxu0 0.0
  %1333 = vmatpush1.msra.mxu0 0.0
  %1334 = vmatprep.subr.mxu0 0.0
  %1335 = vmatpush1.msra.mxu0 0.0
  %1336 = vmatprep.subr.mxu0 0.0
  %1337 = vmatpush1.msra.mxu0 %v1299
  %1338 = vmatprep.subr.mxu0 0.0
  %1339 = vmatpush1.msra.mxu0 %v1298
  %1340 = vmatprep.subr.mxu0 0.0
  %1341 = vmatpush1.msra.mxu0 %v1297
  %1342 = vmatprep.subr.mxu0 0.0
  %1343 = vmatpush1.msra.mxu0 %v1296
  %1344 = vmatprep.subr.mxu0 0.0
  %1345 = vmatpush2.msra.mxu0 0.0
  %1346 = vmatprep.subr.mxu0 0.0
  %1347 = vmatpush2.msra.mxu0 0.0
  %1348 = vmatprep.subr.mxu0 0.0
  %1349 = vmatpush2.msra.mxu0 0.0
  %1350 = vmatprep.subr.mxu0 0.0
  %1351 = vmatpush2.msra.mxu0 0.0
  %1352 = vmatprep.subr.mxu0 0.0
  %1353 = vmatpush2.msra.mxu0 0.0
  %1354 = vmatprep.subr.mxu0 0.0
  %1355 = vmatpush2.msra.mxu0 0.0
  %1356 = vmatprep.subr.mxu0 0.0
  %1357 = vmatpush2.msra.mxu0 0.0
  %1358 = vmatprep.subr.mxu0 0.0
  %1359 = vmatpush2.msra.mxu0 0.0
  %1360 = vmatprep.subr.mxu0 0.0
  %1361 = vmatpush2.msra.mxu0 0.0
  %1362 = vmatprep.subr.mxu0 0.0
  %1363 = vmatpush2.msra.mxu0 0.0
  %1364 = vmatprep.subr.mxu0 0.0
  %1365 = vmatpush2.msra.mxu0 0.0
  %1366 = vmatprep.subr.mxu0 0.0
  %1367 = vmatpush2.msra.mxu0 0.0
  %1368 = vmatprep.subr.mxu0 0.0
  %1369 = vmatpush2.msra.mxu0 0.0
  %1370 = vmatprep.subr.mxu0 0.0
  %1371 = vmatpush2.msra.mxu0 0.0
  %1372 = vmatprep.subr.mxu0 0.0
  %1373 = vmatpush2.msra.mxu0 0.0
  %1374 = vmatprep.subr.mxu0 0.0
  %1375 = vmatpush2.msra.mxu0 0.0
  %1376 = vmatprep.mubr.f32.mxu0 0.0
  %1377 = vmatmul.mubr.f32.gmra.mxu0 %v1301
  %v1378 = vpop.f32.mrf.mxu0
  %v1379 = vpop.f32.mrf.mxu0
  %1380 = vmatprep.mubr.f32.mxu0 0.0
  %1381 = vmatmul.mubr.f32.gmra.mxu0 %v1304
  %v1382 = vpop.f32.mrf.mxu0
  %v1383 = vadd.f32 0.0, %v1382
  %v1384 = vpop.f32.mrf.mxu0
  %1385 = vmatprep.mubr.f32.mxu0 0.0
  %1386 = vmatmul.mubr.f32.gmra.mxu0 %v1307
  %v1387 = vpop.f32.mrf.mxu0
  %v1388 = vpop.f32.mrf.mxu0
  %1389 = vmatprep.mubr.f32.mxu0 0.0
  %1390 = vmatmul.mubr.f32.gmra.mxu0 %v1310
  %v1391 = vpop.f32.mrf.mxu0
  %v1392 = vadd.f32 0.0, %v1391
  %v1393 = vpop.f32.mrf.mxu0
  %1394 = vdwg.mxu0
  %v1396 = vsel %vm1283, %v1288, 0
  %v1399 = vsel %vm1283, %v1289, 0
  %v1402 = vsel %vm1283, %v1290, 0
  %v1405 = vsel %vm1283, %v1291, 0
  %1407 = vmatprep.subr.mxu0 0.0
  %1408 = vmatpush1.msra.mxu0 0.0
  %1409 = vmatprep.subr.mxu0 0.0
  %1410 = vmatpush1.msra.mxu0 0.0
  %1411 = vmatprep.subr.mxu0 0.0
  %1412 = vmatpush1.msra.mxu0 0.0
  %1413 = vmatprep.subr.mxu0 0.0
  %1414 = vmatpush1.msra.mxu0 0.0
  %1415 = vmatprep.subr.mxu0 0.0
  %1416 = vmatpush1.msra.mxu0 0.0
  %1417 = vmatprep.subr.mxu0 0.0
  %1418 = vmatpush1.msra.mxu0 0.0
  %1419 = vmatprep.subr.mxu0 0.0
  %1420 = vmatpush1.msra.mxu0 0.0
  %1421 = vmatprep.subr.mxu0 0.0
  %1422 = vmatpush1.msra.mxu0 0.0
  %1423 = vmatprep.subr.mxu0 0.0
  %1424 = vmatpush1.msra.mxu0 0.0
  %1425 = vmatprep.subr.mxu0 0.0
  %1426 = vmatpush1.msra.mxu0 0.0
  %1427 = vmatprep.subr.mxu0 0.0
  %1428 = vmatpush1.msra.mxu0 0.0
  %1429 = vmatprep.subr.mxu0 0.0
  %1430 = vmatpush1.msra.mxu0 0.0
  %1431 = vmatprep.subr.mxu0 0.0
  %1432 = vmatpush1.msra.mxu0 %v1295
  %1433 = vmatprep.subr.mxu0 0.0
  %1434 = vmatpush1.msra.mxu0 %v1294
  %1435 = vmatprep.subr.mxu0 0.0
  %1436 = vmatpush1.msra.mxu0 %v1293
  %1437 = vmatprep.subr.mxu0 0.0
  %1438 = vmatpush1.msra.mxu0 %v1292
  %1439 = vmatprep.subr.mxu0 0.0
  %1440 = vmatpush2.msra.mxu0 0.0
  %1441 = vmatprep.subr.mxu0 0.0
  %1442 = vmatpush2.msra.mxu0 0.0
  %1443 = vmatprep.subr.mxu0 0.0
  %1444 = vmatpush2.msra.mxu0 0.0
  %1445 = vmatprep.subr.mxu0 0.0
  %1446 = vmatpush2.msra.mxu0 0.0
  %1447 = vmatprep.subr.mxu0 0.0
  %1448 = vmatpush2.msra.mxu0 0.0
  %1449 = vmatprep.subr.mxu0 0.0
  %1450 = vmatpush2.msra.mxu0 0.0
  %1451 = vmatprep.subr.mxu0 0.0
  %1452 = vmatpush2.msra.mxu0 0.0
  %1453 = vmatprep.subr.mxu0 0.0
  %1454 = vmatpush2.msra.mxu0 0.0
  %1455 = vmatprep.subr.mxu0 0.0
  %1456 = vmatpush2.msra.mxu0 0.0
  %1457 = vmatprep.subr.mxu0 0.0
  %1458 = vmatpush2.msra.mxu0 0.0
  %1459 = vmatprep.subr.mxu0 0.0
  %1460 = vmatpush2.msra.mxu0 0.0
  %1461 = vmatprep.subr.mxu0 0.0
  %1462 = vmatpush2.msra.mxu0 0.0
  %1463 = vmatprep.subr.mxu0 0.0
  %1464 = vmatpush2.msra.mxu0 0.0
  %1465 = vmatprep.subr.mxu0 0.0
  %1466 = vmatpush2.msra.mxu0 0.0
  %1467 = vmatprep.subr.mxu0 0.0
  %1468 = vmatpush2.msra.mxu0 0.0
  %1469 = vmatprep.subr.mxu0 0.0
  %1470 = vmatpush2.msra.mxu0 0.0
  %1471 = vmatprep.mubr.f32.mxu0 0.0
  %1472 = vmatmul.mubr.f32.gmra.mxu0 %v1396
  %v1473 = vpop.f32.mrf.mxu0
  %v1474 = vpop.f32.mrf.mxu0
  %1475 = vmatprep.mubr.f32.mxu0 0.0
  %1476 = vmatmul.mubr.f32.gmra.mxu0 %v1399
  %v1477 = vpop.f32.mrf.mxu0
  %v1478 = vadd.f32 %v1383, %v1477
  %v1479 = vpop.f32.mrf.mxu0
  %1480 = vmatprep.mubr.f32.mxu0 0.0
  %1481 = vmatmul.mubr.f32.gmra.mxu0 %v1402
  %v1482 = vpop.f32.mrf.mxu0
  %v1483 = vpop.f32.mrf.mxu0
  %1484 = vmatprep.mubr.f32.mxu0 0.0
  %1485 = vmatmul.mubr.f32.gmra.mxu0 %v1405
  %v1486 = vpop.f32.mrf.mxu0
  %v1487 = vadd.f32 %v1392, %v1486
  %v1488 = vpop.f32.mrf.mxu0
  %1489 = vdwg.mxu0
  %v1490 = vld [vmem:[%s14] sm:$0x1]
  %v1492 = vlaneseq
  %v1493 = vshrl.u32 %v1492, 7
  %v1494 = vsub.s32 0, %v1493
  %v1495 = vrot.slane %v1490, %v1494
  %v1497 = vadd.f32 %v1478, %v1495
  %v1498 = vadd.f32 %v1487, %v1495
  %v1499 = vmax.f32 %v1497, 0.0
  %v1500 = vmax.f32 %v1498, 0.0
  %v1501 = vld [vmem:[%s15] sm:$0xff]
  %v1502 = vld [vmem:[%s15 + $0x8] sm:$0xff]
  %v1503 = vld [vmem:[%s16] sm:$0x1]
  %v1505 = vlaneseq
  %v1506 = vshrl.u32 %v1505, 7
  %v1507 = vsub.s32 0, %v1506
  %v1508 = vrot.slane %v1503, %v1507
  %1510 = vmatprep.subr.mxu0 0.0
  %1511 = vmatpush1.msra.mxu0 0.0
  %1512 = vmatprep.subr.mxu0 0.0
  %1513 = vmatpush1.msra.mxu0 0.0
  %1514 = vmatprep.subr.mxu0 0.0
  %1515 = vmatpush1.msra.mxu0 0.0
  %1516 = vmatprep.subr.mxu0 0.0
  %1517 = vmatpush1.msra.mxu0 0.0
  %1518 = vmatprep.subr.mxu0 0.0
  %1519 = vmatpush1.msra.mxu0 0.0
  %1520 = vmatprep.subr.mxu0 0.0
  %1521 = vmatpush1.msra.mxu0 0.0
  %1522 = vmatprep.subr.mxu0 0.0
  %1523 = vmatpush1.msra.mxu0 0.0
  %1524 = vmatprep.subr.mxu0 0.0
  %1525 = vmatpush1.msra.mxu0 0.0
  %1526 = vmatprep.subr.mxu0 0.0
  %1527 = vmatpush1.msra.mxu0 0.0
  %1528 = vmatprep.subr.mxu0 0.0
  %1529 = vmatpush1.msra.mxu0 0.0
  %1530 = vmatprep.subr.mxu0 0.0
  %1531 = vmatpush1.msra.mxu0 0.0
  %1532 = vmatprep.subr.mxu0 0.0
  %1533 = vmatpush1.msra.mxu0 0.0
  %1534 = vmatprep.subr.mxu0 0.0
  %1535 = vmatpush1.msra.mxu0 0.0
  %1536 = vmatprep.subr.mxu0 0.0
  %1537 = vmatpush1.msra.mxu0 0.0
  %1538 = vmatprep.subr.mxu0 0.0
  %1539 = vmatpush1.msra.mxu0 %v1502
  %1540 = vmatprep.subr.mxu0 0.0
  %1541 = vmatpush1.msra.mxu0 %v1501
  %1542 = vmatprep.subr.mxu0 0.0
  %1543 = vmatpush2.msra.mxu0 0.0
  %1544 = vmatprep.subr.mxu0 0.0
  %1545 = vmatpush2.msra.mxu0 0.0
  %1546 = vmatprep.subr.mxu0 0.0
  %1547 = vmatpush2.msra.mxu0 0.0
  %1548 = vmatprep.subr.mxu0 0.0
  %1549 = vmatpush2.msra.mxu0 0.0
  %1550 = vmatprep.subr.mxu0 0.0
  %1551 = vmatpush2.msra.mxu0 0.0
  %1552 = vmatprep.subr.mxu0 0.0
  %1553 = vmatpush2.msra.mxu0 0.0
  %1554 = vmatprep.subr.mxu0 0.0
  %1555 = vmatpush2.msra.mxu0 0.0
  %1556 = vmatprep.subr.mxu0 0.0
  %1557 = vmatpush2.msra.mxu0 0.0
  %1558 = vmatprep.subr.mxu0 0.0
  %1559 = vmatpush2.msra.mxu0 0.0
  %1560 = vmatprep.subr.mxu0 0.0
  %1561 = vmatpush2.msra.mxu0 0.0
  %1562 = vmatprep.subr.mxu0 0.0
  %1563 = vmatpush2.msra.mxu0 0.0
  %1564 = vmatprep.subr.mxu0 0.0
  %1565 = vmatpush2.msra.mxu0 0.0
  %1566 = vmatprep.subr.mxu0 0.0
  %1567 = vmatpush2.msra.mxu0 0.0
  %1568 = vmatprep.subr.mxu0 0.0
  %1569 = vmatpush2.msra.mxu0 0.0
  %1570 = vmatprep.subr.mxu0 0.0
  %1571 = vmatpush2.msra.mxu0 0.0
  %1572 = vmatprep.subr.mxu0 0.0
  %1573 = vmatpush2.msra.mxu0 0.0
  %1574 = vmatprep.mubr.f32.mxu0 0.0
  %1575 = vmatmul.mubr.f32.gmra.mxu0 %v1075
  %v1576 = vpop.f32.mrf.mxu0
  %v1577 = vpop.f32.mrf.mxu0
  %1578 = vmatprep.mubr.f32.mxu0 0.0
  %1579 = vmatmul.mubr.f32.gmra.mxu0 %v1078
  %v1580 = vpop.f32.mrf.mxu0
  %v1581 = vadd.f32 %v1508, %v1580
  %v1582 = vpop.f32.mrf.mxu0
  %1583 = vmatprep.mubr.f32.mxu0 0.0
  %1584 = vmatmul.mubr.f32.gmra.mxu0 %v1081
  %v1585 = vpop.f32.mrf.mxu0
  %v1586 = vpop.f32.mrf.mxu0
  %1587 = vmatprep.mubr.f32.mxu0 0.0
  %1588 = vmatmul.mubr.f32.gmra.mxu0 %v1084
  %v1589 = vpop.f32.mrf.mxu0
  %v1590 = vadd.f32 %v1508, %v1589
  %v1591 = vpop.f32.mrf.mxu0
  %1592 = vdwg.mxu0
  %v1593 = vadd.f32 %v1499, %v1581
  %v1594 = vadd.f32 %v1500, %v1590
  %v1595 = vmax.f32 %v1593, 0.0
  %v1596 = vmax.f32 %v1594, 0.0
  %v1597 = vld [vmem:[%s17] sm:$0xff]
  %v1598 = vld [vmem:[%s17 + $0x8] sm:$0xff]
  %v1599 = vld [vmem:[%s17 + $0x10] sm:$0xff]
  %v1600 = vld [vmem:[%s17 + $0x18] sm:$0xff]
  %v1601 = vld [vmem:[%s18] sm:$0x1]
  %v1603 = vlaneseq
  %v1604 = vshrl.u32 %v1603, 7
  %v1605 = vsub.s32 0, %v1604
  %v1606 = vrot.slane %v1601, %v1605
  %v1610 = vrot.slane %v1595, 7
  %v1611 = vrot.slane %v1596, 6
  %vm1612 = vcmask 1041409
  %v1613 = vsel %vm1612, %v1611, %v1610
  %v1614 = vsel %vm1283, %v1613, 0
  %1616 = vmatprep.subr.mxu0 0.0
  %1617 = vmatpush1.msra.mxu0 0.0
  %1618 = vmatprep.subr.mxu0 0.0
  %1619 = vmatpush1.msra.mxu0 0.0
  %1620 = vmatprep.subr.mxu0 0.0
  %1621 = vmatpush1.msra.mxu0 0.0
  %1622 = vmatprep.subr.mxu0 0.0
  %1623 = vmatpush1.msra.mxu0 0.0
  %1624 = vmatprep.subr.mxu0 0.0
  %1625 = vmatpush1.msra.mxu0 0.0
  %1626 = vmatprep.subr.mxu0 0.0
  %1627 = vmatpush1.msra.mxu0 0.0
  %1628 = vmatprep.subr.mxu0 0.0
  %1629 = vmatpush1.msra.mxu0 0.0
  %1630 = vmatprep.subr.mxu0 0.0
  %1631 = vmatpush1.msra.mxu0 0.0
  %1632 = vmatprep.subr.mxu0 0.0
  %1633 = vmatpush1.msra.mxu0 0.0
  %1634 = vmatprep.subr.mxu0 0.0
  %1635 = vmatpush1.msra.mxu0 0.0
  %1636 = vmatprep.subr.mxu0 0.0
  %1637 = vmatpush1.msra.mxu0 0.0
  %1638 = vmatprep.subr.mxu0 0.0
  %1639 = vmatpush1.msra.mxu0 0.0
  %1640 = vmatprep.subr.mxu0 0.0
  %1641 = vmatpush1.msra.mxu0 %v1600
  %1642 = vmatprep.subr.mxu0 0.0
  %1643 = vmatpush1.msra.mxu0 %v1599
  %1644 = vmatprep.subr.mxu0 0.0
  %1645 = vmatpush1.msra.mxu0 %v1598
  %1646 = vmatprep.subr.mxu0 0.0
  %1647 = vmatpush1.msra.mxu0 %v1597
  %1648 = vmatprep.subr.mxu0 0.0
  %1649 = vmatpush2.msra.mxu0 0.0
  %1650 = vmatprep.subr.mxu0 0.0
  %1651 = vmatpush2.msra.mxu0 0.0
  %1652 = vmatprep.subr.mxu0 0.0
  %1653 = vmatpush2.msra.mxu0 0.0
  %1654 = vmatprep.subr.mxu0 0.0
  %1655 = vmatpush2.msra.mxu0 0.0
  %1656 = vmatprep.subr.mxu0 0.0
  %1657 = vmatpush2.msra.mxu0 0.0
  %1658 = vmatprep.subr.mxu0 0.0
  %1659 = vmatpush2.msra.mxu0 0.0
  %1660 = vmatprep.subr.mxu0 0.0
  %1661 = vmatpush2.msra.mxu0 0.0
  %1662 = vmatprep.subr.mxu0 0.0
  %1663 = vmatpush2.msra.mxu0 0.0
  %1664 = vmatprep.subr.mxu0 0.0
  %1665 = vmatpush2.msra.mxu0 0.0
  %1666 = vmatprep.subr.mxu0 0.0
  %1667 = vmatpush2.msra.mxu0 0.0
  %1668 = vmatprep.subr.mxu0 0.0
  %1669 = vmatpush2.msra.mxu0 0.0
  %1670 = vmatprep.subr.mxu0 0.0
  %1671 = vmatpush2.msra.mxu0 0.0
  %1672 = vmatprep.subr.mxu0 0.0
  %1673 = vmatpush2.msra.mxu0 0.0
  %1674 = vmatprep.subr.mxu0 0.0
  %1675 = vmatpush2.msra.mxu0 0.0
  %1676 = vmatprep.subr.mxu0 0.0
  %1677 = vmatpush2.msra.mxu0 0.0
  %1678 = vmatprep.subr.mxu0 0.0
  %1679 = vmatpush2.msra.mxu0 0.0
  %1680 = vmatprep.mubr.f32.mxu0 0.0
  %1681 = vmatmul.mubr.f32.gmra.mxu0 %v1614
  %v1682 = vpop.f32.mrf.mxu0
  %v1683 = vadd.f32 %v1606, %v1682
  %v1684 = vpop.f32.mrf.mxu0
  %1685 = vdwg.mxu0
  %vm1686 = vcmask 91136
  %1687 = vst.msk [vmem:[%s19] sm:$0x3] %vm1686, %v1683
  // Predicated region
  $region78: #{forward.1} parent=0 // pred_check
    _
  $region79: #{forward.1} parent=0 // pred_check_branch
    %1689 = sbr.rel (0) target = $region81
  $region80: #{forward.1} parent=0 // pred_region
    _
  $region81: #{forward.1} parent=0 // pred_fallthru
    _
  // Predicated region
  $region82: #{forward.1} parent=0 // pred_check
    _
  $region83: #{forward.1} parent=0 // pred_check_branch
    %1691 = sbr.rel (0) target = $region85
  $region84: #{forward.1} parent=0 // pred_region
    _
  $region85: #{forward.1} parent=0 // pred_fallthru
    _

</llo_original>
